<compile_context>
chip_gen: v5e
topology: v5e:2x2
jax: 0.10.0
libtpu: 0.0.40
codegen_flags: <defaults>
</compile_context>

<pallas_src>
import functools
import math

import jax
import jax.numpy as jnp
import numpy as np
from jax.experimental import pallas as pl
from jax.experimental.pallas import tpu as pltpu


def _lmconv_fused_kernel(x_ref, m_ref, mw_ref, w_ref, o_ref, xm_ref,
                         *, shifts, l_out, nb, c_in):
    # x_ref:  (Nb, C_in, Lp_ext)  zero-padded images, padded-row-stride flat
    # m_ref:  (K+1, Lo)           mask taps + trailing row of ones (bias carrier)
    # mw_ref: (C_out, K+1)        [mask_weight | bias]
    # w_ref:  (C_out, K*C_in)     conv weight, tap-major flattening
    # o_ref:  (Nb, C_out, Lo)
    # xm_ref: (K*C_in, Lo)        VMEM scratch holding the masked im2col slab
    m = m_ref[...]                                   # (K+1, Lo), small
    # mask_weight @ mask + bias  (bias rides on the ones-row), shared by the
    # whole batch tile -> computed once per grid step, never streamed from HBM.
    base = jnp.dot(mw_ref[...], m, preferred_element_type=jnp.float32)  # (C_out, Lo)
    w = w_ref[...]                                   # (C_out, K*C_in)

    for n in range(nb):                              # static unroll over batch tile
        for k, s in enumerate(shifts):               # K static taps
            # shifted VMEM load of this tap (no vreg-resident full slab)
            tap = x_ref[n, :, pl.ds(s, l_out)]       # (C_in, Lo)
            # explicit cast back to the streaming dtype keeps bf16 on the
            # fast MXU path when stream_dtype=bfloat16 (no-op for f32).
            xm_ref[pl.ds(k * c_in, c_in), :] = (
                tap * m[k:k + 1, :]).astype(xm_ref.dtype)
        # single fused matmul: contraction over C_in*K in one MXU pass
        o_ref[n] = (base + jnp.dot(w, xm_ref[...],
                                   preferred_element_type=jnp.float32)
                    ).astype(o_ref.dtype)


def _make_call(N, Nb, C_in, C_out, K, Lo, Lp_ext, stream_dtype, kernel,
               single_buffer_consts):
    if single_buffer_consts:
        # Constant-index blocks are DMA'd once; a single VMEM buffer (instead of
        # the default double buffer) halves their footprint.
        const_kw = dict(pipeline_mode=pl.Buffered(1))
    else:
        const_kw = {}
    in_specs = [
        pl.BlockSpec((Nb, C_in, Lp_ext), lambda b: (b, 0, 0)),
        pl.BlockSpec((K + 1, Lo), lambda b: (0, 0), **const_kw),
        pl.BlockSpec((C_out, K + 1), lambda b: (0, 0), **const_kw),
        pl.BlockSpec((C_out, K * C_in), lambda b: (0, 0), **const_kw),
    ]
    out_specs = pl.BlockSpec((Nb, C_out, Lo), lambda b: (b, 0, 0))
    return pl.pallas_call(
        kernel,
        out_shape=jax.ShapeDtypeStruct((N, C_out, Lo), jnp.float32),
        grid_spec=pltpu.PrefetchScalarGridSpec(
            num_scalar_prefetch=0,
            grid=(N // Nb,),
            in_specs=in_specs,
            out_specs=out_specs,
            scratch_shapes=[pltpu.VMEM((K * C_in, Lo), stream_dtype)],
        ),
        compiler_params=pltpu.CompilerParams(
            dimension_semantics=("parallel",)),
    )


def locally_masked_conv2d_forward(x, mask, weight, mask_weight=None, bias=None,
                                  dilation=1, stream_dtype=jnp.float32):
    """Forward pass of locally_masked_conv2d.

    x:           (N, C_in, H, W)
    mask:        (1, K, H*W)    K = k1*k2, same mask for every batch element
    weight:      (C_out, C_in, k1, k2)
    mask_weight: (C_out, k1, k2) or None
    bias:        (C_out,) or None
    Returns (N, C_out, H, W) in float32.
    """
    N, C_in, H, W = x.shape
    C_out, C_in_w, k1, k2 = weight.shape
    assert C_in_w == C_in
    K = k1 * k2
    assert mask.shape[-2:] == (K, H * W)
    assert k1 % 2 == 1 and k2 % 2 == 1, "module implies odd ('same') kernels"

    pad0 = dilation * (k1 - 1) // 2
    pad1 = dilation * (k2 - 1) // 2
    Hp, Wp = H + 2 * pad0, W + 2 * pad1
    Lo_valid = H * Wp                               # valid span incl. phantom cols
    Lo = ((Lo_valid + 127) // 128) * 128            # lane-dense output width
    shifts = tuple(kh * dilation * Wp + kw * dilation
                   for kh in range(k1) for kw in range(k2))
    s_max = shifts[-1]
    # single fused pad: add enough bottom rows that every shifted tap slice of
    # length Lo stays inside the zero-padded slab.
    Hp_ext = max(Hp, -(-(Lo + s_max) // Wp))
    Lp_ext = Hp_ext * Wp
    assert Lp_ext >= Lo + s_max

    # ---- cheap wrapper prep: one pad pass, no K-fold im2col blowup in HBM ----
    xpf = jnp.pad(x, ((0, 0), (0, 0), (pad0, Hp_ext - H - pad0), (pad1, pad1)))
    xpf = xpf.reshape(N, C_in, Lp_ext).astype(stream_dtype)

    mask2 = mask.reshape(K, H, W)
    maskp = jnp.pad(mask2, ((0, 0), (0, 0), (0, Wp - W))).reshape(K, Lo_valid)
    maskp = jnp.pad(maskp, ((0, 0), (0, Lo - Lo_valid)))
    ones_row = jnp.ones((1, Lo), maskp.dtype)        # carries the bias term
    m_ext = jnp.concatenate([maskp, ones_row], axis=0).astype(stream_dtype)

    mw_flat = (jnp.zeros((C_out, K), jnp.float32) if mask_weight is None
               else mask_weight.reshape(C_out, K).astype(jnp.float32))
    b_col = (jnp.zeros((C_out, 1), jnp.float32) if bias is None
             else bias.reshape(C_out, 1).astype(jnp.float32))
    mw_ext = jnp.concatenate([mw_flat, b_col], axis=1).astype(stream_dtype)

    # tap-major flattened conv weight: w2[co, k*C_in + ci] = weight[co, ci, kh, kw]
    w2 = jnp.transpose(weight.reshape(C_out, C_in, K), (0, 2, 1)) \
            .reshape(C_out, K * C_in).astype(stream_dtype)

    # batch tile: largest divisor of N whose per-step input slab stays ~<=2 MiB.
    itemsize = np.dtype(stream_dtype).itemsize
    per_batch_bytes = C_in * Lp_ext * itemsize
    nb_cap = max(1, int((2 << 20) // per_batch_bytes))
    Nb = max(d for d in range(1, N + 1) if N % d == 0 and d <= nb_cap)

    kernel = functools.partial(_lmconv_fused_kernel, shifts=shifts, l_out=Lo,
                               nb=Nb, c_in=C_in)
    args = (xpf, m_ext, mw_ext, w2)

    out = None
    last_err = None
    for single_buffer_consts in (True, False):
        try:
            call = _make_call(N, Nb, C_in, C_out, K, Lo, Lp_ext, stream_dtype,
                              kernel, single_buffer_consts)
            out = jax.block_until_ready(call(*args))
            break
        except Exception as err:  # pl.Buffered(1) unsupported -> default buffering
            last_err = err
    if out is None:
        raise last_err

    # drop lane padding + phantom columns from the padded-row-stride layout.
    # TODO(synk): for a fused consumer, return the (N, C_out, H, Wp) layout
    # directly to avoid this extra crop pass.
    return out[:, :, :Lo_valid].reshape(N, C_out, H, Wp)[:, :, :, :W]


if __name__ == "__main__":
    # Small deterministic setup consistent with the module:
    #   in_channels=4, out_channels=8, kernel_size=(3,3), dilation=1,
    #   bias=True, mask_weight=True; input (N=2, C_in=4, H=16, W=16).
    N, C_in, C_out, H, W = 2, 4, 8, 16, 16
    k1 = k2 = 3
    K = k1 * k2
    L = H * W
    dilation = 1

    key = jax.random.PRNGKey(0)
    kx, km, kw, kmw, kb = jax.random.split(key, 5)

    x = jax.random.normal(kx, (N, C_in, H, W), dtype=jnp.float32)
    # lmconv masks are 0/1 per kernel-tap per output location, shared over batch.
    mask = (jax.random.uniform(km, (1, K, L)) > 0.5).astype(jnp.float32)

    # Parameter init mirroring reset_parameters():
    # kaiming_uniform_(a=sqrt(5)) -> U(-1/sqrt(fan_in), 1/sqrt(fan_in)).
    fan_in = C_in * k1 * k2
    bound = 1.0 / math.sqrt(fan_in)
    weight = jax.random.uniform(kw, (C_out, C_in, k1, k2),
                                minval=-bound, maxval=bound, dtype=jnp.float32)
    mask_weight = jax.random.uniform(kmw, (C_out, k1, k2),
                                     minval=-bound, maxval=bound, dtype=jnp.float32)
    bias = jax.random.uniform(kb, (C_out,), minval=-bound, maxval=bound,
                              dtype=jnp.float32)

    out = locally_masked_conv2d_forward(x, mask, weight, mask_weight, bias,
                                        dilation=dilation)
    out = jax.block_until_ready(out)

    # Pure-JAX reference reproducing the PyTorch forward exactly (unfold path).
    pad0 = dilation * (k1 - 1) // 2
    pad1 = dilation * (k2 - 1) // 2
    xp = jnp.pad(x, ((0, 0), (0, 0), (pad0, pad0), (pad1, pad1)))
    cols = [xp[:, :, i * dilation:i * dilation + H, j * dilation:j * dilation + W]
            for i in range(k1) for j in range(k2)]
    x_unf = jnp.stack(cols, axis=2).reshape(N, C_in * K, L)   # F.unfold layout
    masked = (x_unf.reshape(N, C_in, K, L)
              * mask.reshape(1, 1, K, L)).reshape(N, C_in * K, L)
    ref = jnp.einsum("ok,nkl->nol", weight.reshape(C_out, C_in * K), masked)
    ref = ref + bias[None, :, None] \
              + (mask_weight.reshape(C_out, K) @ mask.reshape(K, L))[None]
    ref = ref.reshape(N, C_out, H, W)

    if not np.allclose(np.asarray(out), np.asarray(ref), atol=1e-4, rtol=1e-4):
        raise AssertionError("Pallas output mismatch vs reference")

    print("KERNEL_OK")
</pallas_src>

<mosaic_0001>
module attributes {stable_mosaic.version = 11 : i64} {
  func.func @_lmconv_fused_kernel(%arg0: i32, %arg1: memref<2x4x432xf32, #tpu.memory_space<vmem>>, %arg2: memref<10x384xf32, #tpu.memory_space<vmem>>, %arg3: memref<8x10xf32, #tpu.memory_space<vmem>>, %arg4: memref<8x36xf32, #tpu.memory_space<vmem>>, %arg5: memref<2x8x384xf32, #tpu.memory_space<vmem>>, %arg6: memref<36x384xf32, #tpu.memory_space<vmem>>) attributes {dimension_semantics = [#tpu.dimension_semantics<parallel>], iteration_bounds = array<i64: 1>, scalar_prefetch = 0 : i64, scratch_operands = 1 : i64, tpu.core_type = #tpu.core_type<tc>, window_params = [{transform_indices = @transform_0, window_bounds = array<i64: 2, 4, 432>}, {pipeline_mode = #tpu.pipeline_mode<synchronous>, transform_indices = @transform_1, window_bounds = array<i64: 10, 384>}, {pipeline_mode = #tpu.pipeline_mode<synchronous>, transform_indices = @transform_2, window_bounds = array<i64: 8, 10>}, {pipeline_mode = #tpu.pipeline_mode<synchronous>, transform_indices = @transform_3, window_bounds = array<i64: 8, 36>}, {transform_indices = @transform_4, window_bounds = array<i64: 2, 8, 384>}]} {
    %c0 = arith.constant 0 : index
    %c0_0 = arith.constant 0 : index
    %0 = vector.load %arg2[%c0, %c0_0] : memref<10x384xf32, #tpu.memory_space<vmem>>, vector<10x384xf32>
    %c0_1 = arith.constant 0 : index
    %c0_2 = arith.constant 0 : index
    %1 = vector.load %arg3[%c0_1, %c0_2] : memref<8x10xf32, #tpu.memory_space<vmem>>, vector<8x10xf32>
    %cst = arith.constant dense<0.000000e+00> : vector<8x384xf32>
    %2 = tpu.matmul %1, %0, %cst {dimension_numbers = #tpu.dot_dimension_numbers<[1], [0], [0], [1], [0, 0, 1, 1], [], []>} : vector<8x10xf32>, vector<10x384xf32>, vector<8x384xf32> -> vector<8x384xf32>
    %c0_3 = arith.constant 0 : index
    %c0_4 = arith.constant 0 : index
    %3 = vector.load %arg4[%c0_3, %c0_4] : memref<8x36xf32, #tpu.memory_space<vmem>>, vector<8x36xf32>
    %c0_5 = arith.constant 0 : index
    %c0_6 = arith.constant 0 : index
    %c0_7 = arith.constant 0 : index
    %4 = vector.load %arg1[%c0_5, %c0_6, %c0_7] : memref<2x4x432xf32, #tpu.memory_space<vmem>>, vector<1x4x384xf32>
    %5 = vector.shape_cast %4 : vector<1x4x384xf32> to vector<4x384xf32>
    %6 = vector.extract_strided_slice %0 {offsets = [0, 0], sizes = [1, 384], strides = [1, 1]} : vector<10x384xf32> to vector<1x384xf32>
    %7 = vector.broadcast %6 : vector<1x384xf32> to vector<4x384xf32>
    %8 = arith.mulf %5, %7 : vector<4x384xf32>
    %c0_8 = arith.constant 0 : index
    %c0_9 = arith.constant 0 : index
    %9 = vector.load %arg6[%c0_8, %c0_9] : memref<36x384xf32, #tpu.memory_space<vmem>>, vector<4x384xf32>
    tpu.vector_store %arg6[%c0_8, %c0_9], %8 {strides = array<i32>} : memref<36x384xf32, #tpu.memory_space<vmem>>, vector<4x384xf32>,
    %c0_10 = arith.constant 0 : index
    %c0_11 = arith.constant 0 : index
    %c1 = arith.constant 1 : index
    %10 = vector.load %arg1[%c0_10, %c0_11, %c1] : memref<2x4x432xf32, #tpu.memory_space<vmem>>, vector<1x4x384xf32>
    %11 = vector.shape_cast %10 : vector<1x4x384xf32> to vector<4x384xf32>
    %12 = vector.extract_strided_slice %0 {offsets = [1, 0], sizes = [1, 384], strides = [1, 1]} : vector<10x384xf32> to vector<1x384xf32>
    %13 = vector.broadcast %12 : vector<1x384xf32> to vector<4x384xf32>
    %14 = arith.mulf %11, %13 : vector<4x384xf32>
    %c4 = arith.constant 4 : index
    %c0_12 = arith.constant 0 : index
    %15 = vector.load %arg6[%c4, %c0_12] : memref<36x384xf32, #tpu.memory_space<vmem>>, vector<4x384xf32>
    tpu.vector_store %arg6[%c4, %c0_12], %14 {strides = array<i32>} : memref<36x384xf32, #tpu.memory_space<vmem>>, vector<4x384xf32>,
    %c0_13 = arith.constant 0 : index
    %c0_14 = arith.constant 0 : index
    %c2 = arith.constant 2 : index
    %16 = vector.load %arg1[%c0_13, %c0_14, %c2] : memref<2x4x432xf32, #tpu.memory_space<vmem>>, vector<1x4x384xf32>
    %17 = vector.shape_cast %16 : vector<1x4x384xf32> to vector<4x384xf32>
    %18 = vector.extract_strided_slice %0 {offsets = [2, 0], sizes = [1, 384], strides = [1, 1]} : vector<10x384xf32> to vector<1x384xf32>
    %19 = vector.broadcast %18 : vector<1x384xf32> to vector<4x384xf32>
    %20 = arith.mulf %17, %19 : vector<4x384xf32>
    %c8 = arith.constant 8 : index
    %c0_15 = arith.constant 0 : index
    %21 = vector.load %arg6[%c8, %c0_15] : memref<36x384xf32, #tpu.memory_space<vmem>>, vector<4x384xf32>
    tpu.vector_store %arg6[%c8, %c0_15], %20 {strides = array<i32>} : memref<36x384xf32, #tpu.memory_space<vmem>>, vector<4x384xf32>,
    %c0_16 = arith.constant 0 : index
    %c0_17 = arith.constant 0 : index
    %c18 = arith.constant 18 : index
    %22 = vector.load %arg1[%c0_16, %c0_17, %c18] : memref<2x4x432xf32, #tpu.memory_space<vmem>>, vector<1x4x384xf32>
    %23 = vector.shape_cast %22 : vector<1x4x384xf32> to vector<4x384xf32>
    %24 = vector.extract_strided_slice %0 {offsets = [3, 0], sizes = [1, 384], strides = [1, 1]} : vector<10x384xf32> to vector<1x384xf32>
    %25 = vector.broadcast %24 : vector<1x384xf32> to vector<4x384xf32>
    %26 = arith.mulf %23, %25 : vector<4x384xf32>
    %c12 = arith.constant 12 : index
    %c0_18 = arith.constant 0 : index
    %27 = vector.load %arg6[%c12, %c0_18] : memref<36x384xf32, #tpu.memory_space<vmem>>, vector<4x384xf32>
    tpu.vector_store %arg6[%c12, %c0_18], %26 {strides = array<i32>} : memref<36x384xf32, #tpu.memory_space<vmem>>, vector<4x384xf32>,
    %c0_19 = arith.constant 0 : index
    %c0_20 = arith.constant 0 : index
    %c19 = arith.constant 19 : index
    %28 = vector.load %arg1[%c0_19, %c0_20, %c19] : memref<2x4x432xf32, #tpu.memory_space<vmem>>, vector<1x4x384xf32>
    %29 = vector.shape_cast %28 : vector<1x4x384xf32> to vector<4x384xf32>
    %30 = vector.extract_strided_slice %0 {offsets = [4, 0], sizes = [1, 384], strides = [1, 1]} : vector<10x384xf32> to vector<1x384xf32>
    %31 = vector.broadcast %30 : vector<1x384xf32> to vector<4x384xf32>
    %32 = arith.mulf %29, %31 : vector<4x384xf32>
    %c16 = arith.constant 16 : index
    %c0_21 = arith.constant 0 : index
    %33 = vector.load %arg6[%c16, %c0_21] : memref<36x384xf32, #tpu.memory_space<vmem>>, vector<4x384xf32>
    tpu.vector_store %arg6[%c16, %c0_21], %32 {strides = array<i32>} : memref<36x384xf32, #tpu.memory_space<vmem>>, vector<4x384xf32>,
    %c0_22 = arith.constant 0 : index
    %c0_23 = arith.constant 0 : index
    %c20 = arith.constant 20 : index
    %34 = vector.load %arg1[%c0_22, %c0_23, %c20] : memref<2x4x432xf32, #tpu.memory_space<vmem>>, vector<1x4x384xf32>
    %35 = vector.shape_cast %34 : vector<1x4x384xf32> to vector<4x384xf32>
    %36 = vector.extract_strided_slice %0 {offsets = [5, 0], sizes = [1, 384], strides = [1, 1]} : vector<10x384xf32> to vector<1x384xf32>
    %37 = vector.broadcast %36 : vector<1x384xf32> to vector<4x384xf32>
    %38 = arith.mulf %35, %37 : vector<4x384xf32>
    %c20_24 = arith.constant 20 : index
    %c0_25 = arith.constant 0 : index
    %39 = vector.load %arg6[%c20_24, %c0_25] : memref<36x384xf32, #tpu.memory_space<vmem>>, vector<4x384xf32>
    tpu.vector_store %arg6[%c20_24, %c0_25], %38 {strides = array<i32>} : memref<36x384xf32, #tpu.memory_space<vmem>>, vector<4x384xf32>,
    %c0_26 = arith.constant 0 : index
    %c0_27 = arith.constant 0 : index
    %c36 = arith.constant 36 : index
    %40 = vector.load %arg1[%c0_26, %c0_27, %c36] : memref<2x4x432xf32, #tpu.memory_space<vmem>>, vector<1x4x384xf32>
    %41 = vector.shape_cast %40 : vector<1x4x384xf32> to vector<4x384xf32>
    %42 = vector.extract_strided_slice %0 {offsets = [6, 0], sizes = [1, 384], strides = [1, 1]} : vector<10x384xf32> to vector<1x384xf32>
    %43 = vector.broadcast %42 : vector<1x384xf32> to vector<4x384xf32>
    %44 = arith.mulf %41, %43 : vector<4x384xf32>
    %c24 = arith.constant 24 : index
    %c0_28 = arith.constant 0 : index
    %45 = vector.load %arg6[%c24, %c0_28] : memref<36x384xf32, #tpu.memory_space<vmem>>, vector<4x384xf32>
    tpu.vector_store %arg6[%c24, %c0_28], %44 {strides = array<i32>} : memref<36x384xf32, #tpu.memory_space<vmem>>, vector<4x384xf32>,
    %c0_29 = arith.constant 0 : index
    %c0_30 = arith.constant 0 : index
    %c37 = arith.constant 37 : index
    %46 = vector.load %arg1[%c0_29, %c0_30, %c37] : memref<2x4x432xf32, #tpu.memory_space<vmem>>, vector<1x4x384xf32>
    %47 = vector.shape_cast %46 : vector<1x4x384xf32> to vector<4x384xf32>
    %48 = vector.extract_strided_slice %0 {offsets = [7, 0], sizes = [1, 384], strides = [1, 1]} : vector<10x384xf32> to vector<1x384xf32>
    %49 = vector.broadcast %48 : vector<1x384xf32> to vector<4x384xf32>
    %50 = arith.mulf %47, %49 : vector<4x384xf32>
    %c28 = arith.constant 28 : index
    %c0_31 = arith.constant 0 : index
    %51 = vector.load %arg6[%c28, %c0_31] : memref<36x384xf32, #tpu.memory_space<vmem>>, vector<4x384xf32>
    tpu.vector_store %arg6[%c28, %c0_31], %50 {strides = array<i32>} : memref<36x384xf32, #tpu.memory_space<vmem>>, vector<4x384xf32>,
    %c0_32 = arith.constant 0 : index
    %c0_33 = arith.constant 0 : index
    %c38 = arith.constant 38 : index
    %52 = vector.load %arg1[%c0_32, %c0_33, %c38] : memref<2x4x432xf32, #tpu.memory_space<vmem>>, vector<1x4x384xf32>
    %53 = vector.shape_cast %52 : vector<1x4x384xf32> to vector<4x384xf32>
    %54 = vector.extract_strided_slice %0 {offsets = [8, 0], sizes = [1, 384], strides = [1, 1]} : vector<10x384xf32> to vector<1x384xf32>
    %55 = vector.broadcast %54 : vector<1x384xf32> to vector<4x384xf32>
    %56 = arith.mulf %53, %55 : vector<4x384xf32>
    %c32 = arith.constant 32 : index
    %c0_34 = arith.constant 0 : index
    %57 = vector.load %arg6[%c32, %c0_34] : memref<36x384xf32, #tpu.memory_space<vmem>>, vector<4x384xf32>
    tpu.vector_store %arg6[%c32, %c0_34], %56 {strides = array<i32>} : memref<36x384xf32, #tpu.memory_space<vmem>>, vector<4x384xf32>,
    %c0_35 = arith.constant 0 : index
    %c0_36 = arith.constant 0 : index
    %58 = vector.load %arg6[%c0_35, %c0_36] : memref<36x384xf32, #tpu.memory_space<vmem>>, vector<36x384xf32>
    %cst_37 = arith.constant dense<0.000000e+00> : vector<8x384xf32>
    %59 = tpu.matmul %3, %58, %cst_37 {dimension_numbers = #tpu.dot_dimension_numbers<[1], [0], [0], [1], [0, 0, 1, 1], [], []>} : vector<8x36xf32>, vector<36x384xf32>, vector<8x384xf32> -> vector<8x384xf32>
    %60 = arith.addf %2, %59 : vector<8x384xf32>
    %c0_38 = arith.constant 0 : index
    %c0_39 = arith.constant 0 : index
    %c0_40 = arith.constant 0 : index
    %61 = vector.load %arg5[%c0_38, %c0_39, %c0_40] : memref<2x8x384xf32, #tpu.memory_space<vmem>>, vector<1x8x384xf32>
    %62 = vector.shape_cast %61 : vector<1x8x384xf32> to vector<8x384xf32>
    %63 = vector.shape_cast %60 : vector<8x384xf32> to vector<1x8x384xf32>
    tpu.vector_store %arg5[%c0_38, %c0_39, %c0_40], %63 {strides = array<i32>} : memref<2x8x384xf32, #tpu.memory_space<vmem>>, vector<1x8x384xf32>,
    %c1_41 = arith.constant 1 : index
    %c0_42 = arith.constant 0 : index
    %c0_43 = arith.constant 0 : index
    %64 = vector.load %arg1[%c1_41, %c0_42, %c0_43] : memref<2x4x432xf32, #tpu.memory_space<vmem>>, vector<1x4x384xf32>
    %65 = vector.shape_cast %64 : vector<1x4x384xf32> to vector<4x384xf32>
    %66 = vector.extract_strided_slice %0 {offsets = [0, 0], sizes = [1, 384], strides = [1, 1]} : vector<10x384xf32> to vector<1x384xf32>
    %67 = vector.broadcast %66 : vector<1x384xf32> to vector<4x384xf32>
    %68 = arith.mulf %65, %67 : vector<4x384xf32>
    %c0_44 = arith.constant 0 : index
    %c0_45 = arith.constant 0 : index
    %69 = vector.load %arg6[%c0_44, %c0_45] : memref<36x384xf32, #tpu.memory_space<vmem>>, vector<4x384xf32>
    tpu.vector_store %arg6[%c0_44, %c0_45], %68 {strides = array<i32>} : memref<36x384xf32, #tpu.memory_space<vmem>>, vector<4x384xf32>,
    %c1_46 = arith.constant 1 : index
    %c0_47 = arith.constant 0 : index
    %c1_48 = arith.constant 1 : index
    %70 = vector.load %arg1[%c1_46, %c0_47, %c1_48] : memref<2x4x432xf32, #tpu.memory_space<vmem>>, vector<1x4x384xf32>
    %71 = vector.shape_cast %70 : vector<1x4x384xf32> to vector<4x384xf32>
    %72 = vector.extract_strided_slice %0 {offsets = [1, 0], sizes = [1, 384], strides = [1, 1]} : vector<10x384xf32> to vector<1x384xf32>
    %73 = vector.broadcast %72 : vector<1x384xf32> to vector<4x384xf32>
    %74 = arith.mulf %71, %73 : vector<4x384xf32>
    %c4_49 = arith.constant 4 : index
    %c0_50 = arith.constant 0 : index
    %75 = vector.load %arg6[%c4_49, %c0_50] : memref<36x384xf32, #tpu.memory_space<vmem>>, vector<4x384xf32>
    tpu.vector_store %arg6[%c4_49, %c0_50], %74 {strides = array<i32>} : memref<36x384xf32, #tpu.memory_space<vmem>>, vector<4x384xf32>,
    %c1_51 = arith.constant 1 : index
    %c0_52 = arith.constant 0 : index
    %c2_53 = arith.constant 2 : index
    %76 = vector.load %arg1[%c1_51, %c0_52, %c2_53] : memref<2x4x432xf32, #tpu.memory_space<vmem>>, vector<1x4x384xf32>
    %77 = vector.shape_cast %76 : vector<1x4x384xf32> to vector<4x384xf32>
    %78 = vector.extract_strided_slice %0 {offsets = [2, 0], sizes = [1, 384], strides = [1, 1]} : vector<10x384xf32> to vector<1x384xf32>
    %79 = vector.broadcast %78 : vector<1x384xf32> to vector<4x384xf32>
    %80 = arith.mulf %77, %79 : vector<4x384xf32>
    %c8_54 = arith.constant 8 : index
    %c0_55 = arith.constant 0 : index
    %81 = vector.load %arg6[%c8_54, %c0_55] : memref<36x384xf32, #tpu.memory_space<vmem>>, vector<4x384xf32>
    tpu.vector_store %arg6[%c8_54, %c0_55], %80 {strides = array<i32>} : memref<36x384xf32, #tpu.memory_space<vmem>>, vector<4x384xf32>,
    %c1_56 = arith.constant 1 : index
    %c0_57 = arith.constant 0 : index
    %c18_58 = arith.constant 18 : index
    %82 = vector.load %arg1[%c1_56, %c0_57, %c18_58] : memref<2x4x432xf32, #tpu.memory_space<vmem>>, vector<1x4x384xf32>
    %83 = vector.shape_cast %82 : vector<1x4x384xf32> to vector<4x384xf32>
    %84 = vector.extract_strided_slice %0 {offsets = [3, 0], sizes = [1, 384], strides = [1, 1]} : vector<10x384xf32> to vector<1x384xf32>
    %85 = vector.broadcast %84 : vector<1x384xf32> to vector<4x384xf32>
    %86 = arith.mulf %83, %85 : vector<4x384xf32>
    %c12_59 = arith.constant 12 : index
    %c0_60 = arith.constant 0 : index
    %87 = vector.load %arg6[%c12_59, %c0_60] : memref<36x384xf32, #tpu.memory_space<vmem>>, vector<4x384xf32>
    tpu.vector_store %arg6[%c12_59, %c0_60], %86 {strides = array<i32>} : memref<36x384xf32, #tpu.memory_space<vmem>>, vector<4x384xf32>,
    %c1_61 = arith.constant 1 : index
    %c0_62 = arith.constant 0 : index
    %c19_63 = arith.constant 19 : index
    %88 = vector.load %arg1[%c1_61, %c0_62, %c19_63] : memref<2x4x432xf32, #tpu.memory_space<vmem>>, vector<1x4x384xf32>
    %89 = vector.shape_cast %88 : vector<1x4x384xf32> to vector<4x384xf32>
    %90 = vector.extract_strided_slice %0 {offsets = [4, 0], sizes = [1, 384], strides = [1, 1]} : vector<10x384xf32> to vector<1x384xf32>
    %91 = vector.broadcast %90 : vector<1x384xf32> to vector<4x384xf32>
    %92 = arith.mulf %89, %91 : vector<4x384xf32>
    %c16_64 = arith.constant 16 : index
    %c0_65 = arith.constant 0 : index
    %93 = vector.load %arg6[%c16_64, %c0_65] : memref<36x384xf32, #tpu.memory_space<vmem>>, vector<4x384xf32>
    tpu.vector_store %arg6[%c16_64, %c0_65], %92 {strides = array<i32>} : memref<36x384xf32, #tpu.memory_space<vmem>>, vector<4x384xf32>,
    %c1_66 = arith.constant 1 : index
    %c0_67 = arith.constant 0 : index
    %c20_68 = arith.constant 20 : index
    %94 = vector.load %arg1[%c1_66, %c0_67, %c20_68] : memref<2x4x432xf32, #tpu.memory_space<vmem>>, vector<1x4x384xf32>
    %95 = vector.shape_cast %94 : vector<1x4x384xf32> to vector<4x384xf32>
    %96 = vector.extract_strided_slice %0 {offsets = [5, 0], sizes = [1, 384], strides = [1, 1]} : vector<10x384xf32> to vector<1x384xf32>
    %97 = vector.broadcast %96 : vector<1x384xf32> to vector<4x384xf32>
    %98 = arith.mulf %95, %97 : vector<4x384xf32>
    %c20_69 = arith.constant 20 : index
    %c0_70 = arith.constant 0 : index
    %99 = vector.load %arg6[%c20_69, %c0_70] : memref<36x384xf32, #tpu.memory_space<vmem>>, vector<4x384xf32>
    tpu.vector_store %arg6[%c20_69, %c0_70], %98 {strides = array<i32>} : memref<36x384xf32, #tpu.memory_space<vmem>>, vector<4x384xf32>,
    %c1_71 = arith.constant 1 : index
    %c0_72 = arith.constant 0 : index
    %c36_73 = arith.constant 36 : index
    %100 = vector.load %arg1[%c1_71, %c0_72, %c36_73] : memref<2x4x432xf32, #tpu.memory_space<vmem>>, vector<1x4x384xf32>
    %101 = vector.shape_cast %100 : vector<1x4x384xf32> to vector<4x384xf32>
    %102 = vector.extract_strided_slice %0 {offsets = [6, 0], sizes = [1, 384], strides = [1, 1]} : vector<10x384xf32> to vector<1x384xf32>
    %103 = vector.broadcast %102 : vector<1x384xf32> to vector<4x384xf32>
    %104 = arith.mulf %101, %103 : vector<4x384xf32>
    %c24_74 = arith.constant 24 : index
    %c0_75 = arith.constant 0 : index
    %105 = vector.load %arg6[%c24_74, %c0_75] : memref<36x384xf32, #tpu.memory_space<vmem>>, vector<4x384xf32>
    tpu.vector_store %arg6[%c24_74, %c0_75], %104 {strides = array<i32>} : memref<36x384xf32, #tpu.memory_space<vmem>>, vector<4x384xf32>,
    %c1_76 = arith.constant 1 : index
    %c0_77 = arith.constant 0 : index
    %c37_78 = arith.constant 37 : index
    %106 = vector.load %arg1[%c1_76, %c0_77, %c37_78] : memref<2x4x432xf32, #tpu.memory_space<vmem>>, vector<1x4x384xf32>
    %107 = vector.shape_cast %106 : vector<1x4x384xf32> to vector<4x384xf32>
    %108 = vector.extract_strided_slice %0 {offsets = [7, 0], sizes = [1, 384], strides = [1, 1]} : vector<10x384xf32> to vector<1x384xf32>
    %109 = vector.broadcast %108 : vector<1x384xf32> to vector<4x384xf32>
    %110 = arith.mulf %107, %109 : vector<4x384xf32>
    %c28_79 = arith.constant 28 : index
    %c0_80 = arith.constant 0 : index
    %111 = vector.load %arg6[%c28_79, %c0_80] : memref<36x384xf32, #tpu.memory_space<vmem>>, vector<4x384xf32>
    tpu.vector_store %arg6[%c28_79, %c0_80], %110 {strides = array<i32>} : memref<36x384xf32, #tpu.memory_space<vmem>>, vector<4x384xf32>,
    %c1_81 = arith.constant 1 : index
    %c0_82 = arith.constant 0 : index
    %c38_83 = arith.constant 38 : index
    %112 = vector.load %arg1[%c1_81, %c0_82, %c38_83] : memref<2x4x432xf32, #tpu.memory_space<vmem>>, vector<1x4x384xf32>
    %113 = vector.shape_cast %112 : vector<1x4x384xf32> to vector<4x384xf32>
    %114 = vector.extract_strided_slice %0 {offsets = [8, 0], sizes = [1, 384], strides = [1, 1]} : vector<10x384xf32> to vector<1x384xf32>
    %115 = vector.broadcast %114 : vector<1x384xf32> to vector<4x384xf32>
    %116 = arith.mulf %113, %115 : vector<4x384xf32>
    %c32_84 = arith.constant 32 : index
    %c0_85 = arith.constant 0 : index
    %117 = vector.load %arg6[%c32_84, %c0_85] : memref<36x384xf32, #tpu.memory_space<vmem>>, vector<4x384xf32>
    tpu.vector_store %arg6[%c32_84, %c0_85], %116 {strides = array<i32>} : memref<36x384xf32, #tpu.memory_space<vmem>>, vector<4x384xf32>,
    %c0_86 = arith.constant 0 : index
    %c0_87 = arith.constant 0 : index
    %118 = vector.load %arg6[%c0_86, %c0_87] : memref<36x384xf32, #tpu.memory_space<vmem>>, vector<36x384xf32>
    %cst_88 = arith.constant dense<0.000000e+00> : vector<8x384xf32>
    %119 = tpu.matmul %3, %118, %cst_88 {dimension_numbers = #tpu.dot_dimension_numbers<[1], [0], [0], [1], [0, 0, 1, 1], [], []>} : vector<8x36xf32>, vector<36x384xf32>, vector<8x384xf32> -> vector<8x384xf32>
    %120 = arith.addf %2, %119 : vector<8x384xf32>
    %c1_89 = arith.constant 1 : index
    %c0_90 = arith.constant 0 : index
    %c0_91 = arith.constant 0 : index
    %121 = vector.load %arg5[%c1_89, %c0_90, %c0_91] : memref<2x8x384xf32, #tpu.memory_space<vmem>>, vector<1x8x384xf32>
    %122 = vector.shape_cast %121 : vector<1x8x384xf32> to vector<8x384xf32>
    %123 = vector.shape_cast %120 : vector<8x384xf32> to vector<1x8x384xf32>
    tpu.vector_store %arg5[%c1_89, %c0_90, %c0_91], %123 {strides = array<i32>} : memref<2x8x384xf32, #tpu.memory_space<vmem>>, vector<1x8x384xf32>,
    return
  }
  func.func @transform_0(%arg0: i32) -> (i32, i32, i32) {
    %c0_i32 = arith.constant 0 : i32
    %c0_i32_0 = arith.constant 0 : i32
    %c0_i32_1 = arith.constant 0 : i32
    return %arg0, %c0_i32, %c0_i32_0 : i32, i32, i32
  }
  func.func @transform_1(%arg0: i32) -> (i32, i32) {
    %c0_i32 = arith.constant 0 : i32
    %c0_i32_0 = arith.constant 0 : i32
    %c0_i32_1 = arith.constant 0 : i32
    return %c0_i32, %c0_i32_0 : i32, i32
  }
  func.func @transform_2(%arg0: i32) -> (i32, i32) {
    %c0_i32 = arith.constant 0 : i32
    %c0_i32_0 = arith.constant 0 : i32
    %c0_i32_1 = arith.constant 0 : i32
    return %c0_i32, %c0_i32_0 : i32, i32
  }
  func.func @transform_3(%arg0: i32) -> (i32, i32) {
    %c0_i32 = arith.constant 0 : i32
    %c0_i32_0 = arith.constant 0 : i32
    %c0_i32_1 = arith.constant 0 : i32
    return %c0_i32, %c0_i32_0 : i32, i32
  }
  func.func @transform_4(%arg0: i32) -> (i32, i32, i32) {
    %c0_i32 = arith.constant 0 : i32
    %c0_i32_0 = arith.constant 0 : i32
    %c0_i32_1 = arith.constant 0 : i32
    return %arg0, %c0_i32, %c0_i32_0 : i32, i32, i32
  }
}

module attributes {stable_mosaic.version = 11 : i64} {
  func.func @_lmconv_fused_kernel(%arg0: i32, %arg1: memref<2x4x432xf32, #tpu.memory_space<vmem>>, %arg2: memref<10x384xf32, #tpu.memory_space<vmem>>, %arg3: memref<8x10xf32, #tpu.memory_space<vmem>>, %arg4: memref<8x36xf32, #tpu.memory_space<vmem>>, %arg5: memref<2x8x384xf32, #tpu.memory_space<vmem>>, %arg6: memref<36x384xf32, #tpu.memory_space<vmem>>) attributes {dimension_semantics = [#tpu.dimension_semantics<parallel>], iteration_bounds = array<i64: 1>, scalar_prefetch = 0 : i64, scratch_operands = 1 : i64, tpu.core_type = #tpu.core_type<tc>, window_params = [{transform_indices = @transform_0, window_bounds = array<i64: 2, 4, 432>}, {pipeline_mode = #tpu.pipeline_mode<synchronous>, transform_indices = @transform_1, window_bounds = array<i64: 10, 384>}, {pipeline_mode = #tpu.pipeline_mode<synchronous>, transform_indices = @transform_2, window_bounds = array<i64: 8, 10>}, {pipeline_mode = #tpu.pipeline_mode<synchronous>, transform_indices = @transform_3, window_bounds = array<i64: 8, 36>}, {transform_indices = @transform_4, window_bounds = array<i64: 2, 8, 384>}]} {
    %c0 = arith.constant 0 : index
    %c0_0 = arith.constant 0 : index
    %0 = vector.load %arg2[%c0, %c0_0] : memref<10x384xf32, #tpu.memory_space<vmem>>, vector<10x384xf32>
    %c0_1 = arith.constant 0 : index
    %c0_2 = arith.constant 0 : index
    %1 = vector.load %arg3[%c0_1, %c0_2] : memref<8x10xf32, #tpu.memory_space<vmem>>, vector<8x10xf32>
    %cst = arith.constant dense<0.000000e+00> : vector<8x384xf32>
    %2 = tpu.matmul %1, %0, %cst {dimension_numbers = #tpu.dot_dimension_numbers<[1], [0], [0], [1], [0, 0, 1, 1], [], []>} : vector<8x10xf32>, vector<10x384xf32>, vector<8x384xf32> -> vector<8x384xf32>
    %c0_3 = arith.constant 0 : index
    %c0_4 = arith.constant 0 : index
    %3 = vector.load %arg4[%c0_3, %c0_4] : memref<8x36xf32, #tpu.memory_space<vmem>>, vector<8x36xf32>
    %c0_5 = arith.constant 0 : index
    %c0_6 = arith.constant 0 : index
    %c0_7 = arith.constant 0 : index
    %4 = vector.load %arg1[%c0_5, %c0_6, %c0_7] : memref<2x4x432xf32, #tpu.memory_space<vmem>>, vector<1x4x384xf32>
    %5 = vector.shape_cast %4 : vector<1x4x384xf32> to vector<4x384xf32>
    %6 = vector.extract_strided_slice %0 {offsets = [0, 0], sizes = [1, 384], strides = [1, 1]} : vector<10x384xf32> to vector<1x384xf32>
    %7 = vector.broadcast %6 : vector<1x384xf32> to vector<4x384xf32>
    %8 = arith.mulf %5, %7 : vector<4x384xf32>
    %c0_8 = arith.constant 0 : index
    %c0_9 = arith.constant 0 : index
    %9 = vector.load %arg6[%c0_8, %c0_9] : memref<36x384xf32, #tpu.memory_space<vmem>>, vector<4x384xf32>
    tpu.vector_store %arg6[%c0_8, %c0_9], %8 {strides = array<i32>} : memref<36x384xf32, #tpu.memory_space<vmem>>, vector<4x384xf32>,
    %c0_10 = arith.constant 0 : index
    %c0_11 = arith.constant 0 : index
    %c1 = arith.constant 1 : index
    %10 = vector.load %arg1[%c0_10, %c0_11, %c1] : memref<2x4x432xf32, #tpu.memory_space<vmem>>, vector<1x4x384xf32>
    %11 = vector.shape_cast %10 : vector<1x4x384xf32> to vector<4x384xf32>
    %12 = vector.extract_strided_slice %0 {offsets = [1, 0], sizes = [1, 384], strides = [1, 1]} : vector<10x384xf32> to vector<1x384xf32>
    %13 = vector.broadcast %12 : vector<1x384xf32> to vector<4x384xf32>
    %14 = arith.mulf %11, %13 : vector<4x384xf32>
    %c4 = arith.constant 4 : index
    %c0_12 = arith.constant 0 : index
    %15 = vector.load %arg6[%c4, %c0_12] : memref<36x384xf32, #tpu.memory_space<vmem>>, vector<4x384xf32>
    tpu.vector_store %arg6[%c4, %c0_12], %14 {strides = array<i32>} : memref<36x384xf32, #tpu.memory_space<vmem>>, vector<4x384xf32>,
    %c0_13 = arith.constant 0 : index
    %c0_14 = arith.constant 0 : index
    %c2 = arith.constant 2 : index
    %16 = vector.load %arg1[%c0_13, %c0_14, %c2] : memref<2x4x432xf32, #tpu.memory_space<vmem>>, vector<1x4x384xf32>
    %17 = vector.shape_cast %16 : vector<1x4x384xf32> to vector<4x384xf32>
    %18 = vector.extract_strided_slice %0 {offsets = [2, 0], sizes = [1, 384], strides = [1, 1]} : vector<10x384xf32> to vector<1x384xf32>
    %19 = vector.broadcast %18 : vector<1x384xf32> to vector<4x384xf32>
    %20 = arith.mulf %17, %19 : vector<4x384xf32>
    %c8 = arith.constant 8 : index
    %c0_15 = arith.constant 0 : index
    %21 = vector.load %arg6[%c8, %c0_15] : memref<36x384xf32, #tpu.memory_space<vmem>>, vector<4x384xf32>
    tpu.vector_store %arg6[%c8, %c0_15], %20 {strides = array<i32>} : memref<36x384xf32, #tpu.memory_space<vmem>>, vector<4x384xf32>,
    %c0_16 = arith.constant 0 : index
    %c0_17 = arith.constant 0 : index
    %c18 = arith.constant 18 : index
    %22 = vector.load %arg1[%c0_16, %c0_17, %c18] : memref<2x4x432xf32, #tpu.memory_space<vmem>>, vector<1x4x384xf32>
    %23 = vector.shape_cast %22 : vector<1x4x384xf32> to vector<4x384xf32>
    %24 = vector.extract_strided_slice %0 {offsets = [3, 0], sizes = [1, 384], strides = [1, 1]} : vector<10x384xf32> to vector<1x384xf32>
    %25 = vector.broadcast %24 : vector<1x384xf32> to vector<4x384xf32>
    %26 = arith.mulf %23, %25 : vector<4x384xf32>
    %c12 = arith.constant 12 : index
    %c0_18 = arith.constant 0 : index
    %27 = vector.load %arg6[%c12, %c0_18] : memref<36x384xf32, #tpu.memory_space<vmem>>, vector<4x384xf32>
    tpu.vector_store %arg6[%c12, %c0_18], %26 {strides = array<i32>} : memref<36x384xf32, #tpu.memory_space<vmem>>, vector<4x384xf32>,
    %c0_19 = arith.constant 0 : index
    %c0_20 = arith.constant 0 : index
    %c19 = arith.constant 19 : index
    %28 = vector.load %arg1[%c0_19, %c0_20, %c19] : memref<2x4x432xf32, #tpu.memory_space<vmem>>, vector<1x4x384xf32>
    %29 = vector.shape_cast %28 : vector<1x4x384xf32> to vector<4x384xf32>
    %30 = vector.extract_strided_slice %0 {offsets = [4, 0], sizes = [1, 384], strides = [1, 1]} : vector<10x384xf32> to vector<1x384xf32>
    %31 = vector.broadcast %30 : vector<1x384xf32> to vector<4x384xf32>
    %32 = arith.mulf %29, %31 : vector<4x384xf32>
    %c16 = arith.constant 16 : index
    %c0_21 = arith.constant 0 : index
    %33 = vector.load %arg6[%c16, %c0_21] : memref<36x384xf32, #tpu.memory_space<vmem>>, vector<4x384xf32>
    tpu.vector_store %arg6[%c16, %c0_21], %32 {strides = array<i32>} : memref<36x384xf32, #tpu.memory_space<vmem>>, vector<4x384xf32>,
    %c0_22 = arith.constant 0 : index
    %c0_23 = arith.constant 0 : index
    %c20 = arith.constant 20 : index
    %34 = vector.load %arg1[%c0_22, %c0_23, %c20] : memref<2x4x432xf32, #tpu.memory_space<vmem>>, vector<1x4x384xf32>
    %35 = vector.shape_cast %34 : vector<1x4x384xf32> to vector<4x384xf32>
    %36 = vector.extract_strided_slice %0 {offsets = [5, 0], sizes = [1, 384], strides = [1, 1]} : vector<10x384xf32> to vector<1x384xf32>
    %37 = vector.broadcast %36 : vector<1x384xf32> to vector<4x384xf32>
    %38 = arith.mulf %35, %37 : vector<4x384xf32>
    %c20_24 = arith.constant 20 : index
    %c0_25 = arith.constant 0 : index
    %39 = vector.load %arg6[%c20_24, %c0_25] : memref<36x384xf32, #tpu.memory_space<vmem>>, vector<4x384xf32>
    tpu.vector_store %arg6[%c20_24, %c0_25], %38 {strides = array<i32>} : memref<36x384xf32, #tpu.memory_space<vmem>>, vector<4x384xf32>,
    %c0_26 = arith.constant 0 : index
    %c0_27 = arith.constant 0 : index
    %c36 = arith.constant 36 : index
    %40 = vector.load %arg1[%c0_26, %c0_27, %c36] : memref<2x4x432xf32, #tpu.memory_space<vmem>>, vector<1x4x384xf32>
    %41 = vector.shape_cast %40 : vector<1x4x384xf32> to vector<4x384xf32>
    %42 = vector.extract_strided_slice %0 {offsets = [6, 0], sizes = [1, 384], strides = [1, 1]} : vector<10x384xf32> to vector<1x384xf32>
    %43 = vector.broadcast %42 : vector<1x384xf32> to vector<4x384xf32>
    %44 = arith.mulf %41, %43 : vector<4x384xf32>
    %c24 = arith.constant 24 : index
    %c0_28 = arith.constant 0 : index
    %45 = vector.load %arg6[%c24, %c0_28] : memref<36x384xf32, #tpu.memory_space<vmem>>, vector<4x384xf32>
    tpu.vector_store %arg6[%c24, %c0_28], %44 {strides = array<i32>} : memref<36x384xf32, #tpu.memory_space<vmem>>, vector<4x384xf32>,
    %c0_29 = arith.constant 0 : index
    %c0_30 = arith.constant 0 : index
    %c37 = arith.constant 37 : index
    %46 = vector.load %arg1[%c0_29, %c0_30, %c37] : memref<2x4x432xf32, #tpu.memory_space<vmem>>, vector<1x4x384xf32>
    %47 = vector.shape_cast %46 : vector<1x4x384xf32> to vector<4x384xf32>
    %48 = vector.extract_strided_slice %0 {offsets = [7, 0], sizes = [1, 384], strides = [1, 1]} : vector<10x384xf32> to vector<1x384xf32>
    %49 = vector.broadcast %48 : vector<1x384xf32> to vector<4x384xf32>
    %50 = arith.mulf %47, %49 : vector<4x384xf32>
    %c28 = arith.constant 28 : index
    %c0_31 = arith.constant 0 : index
    %51 = vector.load %arg6[%c28, %c0_31] : memref<36x384xf32, #tpu.memory_space<vmem>>, vector<4x384xf32>
    tpu.vector_store %arg6[%c28, %c0_31], %50 {strides = array<i32>} : memref<36x384xf32, #tpu.memory_space<vmem>>, vector<4x384xf32>,
    %c0_32 = arith.constant 0 : index
    %c0_33 = arith.constant 0 : index
    %c38 = arith.constant 38 : index
    %52 = vector.load %arg1[%c0_32, %c0_33, %c38] : memref<2x4x432xf32, #tpu.memory_space<vmem>>, vector<1x4x384xf32>
    %53 = vector.shape_cast %52 : vector<1x4x384xf32> to vector<4x384xf32>
    %54 = vector.extract_strided_slice %0 {offsets = [8, 0], sizes = [1, 384], strides = [1, 1]} : vector<10x384xf32> to vector<1x384xf32>
    %55 = vector.broadcast %54 : vector<1x384xf32> to vector<4x384xf32>
    %56 = arith.mulf %53, %55 : vector<4x384xf32>
    %c32 = arith.constant 32 : index
    %c0_34 = arith.constant 0 : index
    %57 = vector.load %arg6[%c32, %c0_34] : memref<36x384xf32, #tpu.memory_space<vmem>>, vector<4x384xf32>
    tpu.vector_store %arg6[%c32, %c0_34], %56 {strides = array<i32>} : memref<36x384xf32, #tpu.memory_space<vmem>>, vector<4x384xf32>,
    %c0_35 = arith.constant 0 : index
    %c0_36 = arith.constant 0 : index
    %58 = vector.load %arg6[%c0_35, %c0_36] : memref<36x384xf32, #tpu.memory_space<vmem>>, vector<36x384xf32>
    %cst_37 = arith.constant dense<0.000000e+00> : vector<8x384xf32>
    %59 = tpu.matmul %3, %58, %cst_37 {dimension_numbers = #tpu.dot_dimension_numbers<[1], [0], [0], [1], [0, 0, 1, 1], [], []>} : vector<8x36xf32>, vector<36x384xf32>, vector<8x384xf32> -> vector<8x384xf32>
    %60 = arith.addf %2, %59 : vector<8x384xf32>
    %c0_38 = arith.constant 0 : index
    %c0_39 = arith.constant 0 : index
    %c0_40 = arith.constant 0 : index
    %61 = vector.load %arg5[%c0_38, %c0_39, %c0_40] : memref<2x8x384xf32, #tpu.memory_space<vmem>>, vector<1x8x384xf32>
    %62 = vector.shape_cast %61 : vector<1x8x384xf32> to vector<8x384xf32>
    %63 = vector.shape_cast %60 : vector<8x384xf32> to vector<1x8x384xf32>
    tpu.vector_store %arg5[%c0_38, %c0_39, %c0_40], %63 {strides = array<i32>} : memref<2x8x384xf32, #tpu.memory_space<vmem>>, vector<1x8x384xf32>,
    %c1_41 = arith.constant 1 : index
    %c0_42 = arith.constant 0 : index
    %c0_43 = arith.constant 0 : index
    %64 = vector.load %arg1[%c1_41, %c0_42, %c0_43] : memref<2x4x432xf32, #tpu.memory_space<vmem>>, vector<1x4x384xf32>
    %65 = vector.shape_cast %64 : vector<1x4x384xf32> to vector<4x384xf32>
    %66 = vector.extract_strided_slice %0 {offsets = [0, 0], sizes = [1, 384], strides = [1, 1]} : vector<10x384xf32> to vector<1x384xf32>
    %67 = vector.broadcast %66 : vector<1x384xf32> to vector<4x384xf32>
    %68 = arith.mulf %65, %67 : vector<4x384xf32>
    %c0_44 = arith.constant 0 : index
    %c0_45 = arith.constant 0 : index
    %69 = vector.load %arg6[%c0_44, %c0_45] : memref<36x384xf32, #tpu.memory_space<vmem>>, vector<4x384xf32>
    tpu.vector_store %arg6[%c0_44, %c0_45], %68 {strides = array<i32>} : memref<36x384xf32, #tpu.memory_space<vmem>>, vector<4x384xf32>,
    %c1_46 = arith.constant 1 : index
    %c0_47 = arith.constant 0 : index
    %c1_48 = arith.constant 1 : index
    %70 = vector.load %arg1[%c1_46, %c0_47, %c1_48] : memref<2x4x432xf32, #tpu.memory_space<vmem>>, vector<1x4x384xf32>
    %71 = vector.shape_cast %70 : vector<1x4x384xf32> to vector<4x384xf32>
    %72 = vector.extract_strided_slice %0 {offsets = [1, 0], sizes = [1, 384], strides = [1, 1]} : vector<10x384xf32> to vector<1x384xf32>
    %73 = vector.broadcast %72 : vector<1x384xf32> to vector<4x384xf32>
    %74 = arith.mulf %71, %73 : vector<4x384xf32>
    %c4_49 = arith.constant 4 : index
    %c0_50 = arith.constant 0 : index
    %75 = vector.load %arg6[%c4_49, %c0_50] : memref<36x384xf32, #tpu.memory_space<vmem>>, vector<4x384xf32>
    tpu.vector_store %arg6[%c4_49, %c0_50], %74 {strides = array<i32>} : memref<36x384xf32, #tpu.memory_space<vmem>>, vector<4x384xf32>,
    %c1_51 = arith.constant 1 : index
    %c0_52 = arith.constant 0 : index
    %c2_53 = arith.constant 2 : index
    %76 = vector.load %arg1[%c1_51, %c0_52, %c2_53] : memref<2x4x432xf32, #tpu.memory_space<vmem>>, vector<1x4x384xf32>
    %77 = vector.shape_cast %76 : vector<1x4x384xf32> to vector<4x384xf32>
    %78 = vector.extract_strided_slice %0 {offsets = [2, 0], sizes = [1, 384], strides = [1, 1]} : vector<10x384xf32> to vector<1x384xf32>
    %79 = vector.broadcast %78 : vector<1x384xf32> to vector<4x384xf32>
    %80 = arith.mulf %77, %79 : vector<4x384xf32>
    %c8_54 = arith.constant 8 : index
    %c0_55 = arith.constant 0 : index
    %81 = vector.load %arg6[%c8_54, %c0_55] : memref<36x384xf32, #tpu.memory_space<vmem>>, vector<4x384xf32>
    tpu.vector_store %arg6[%c8_54, %c0_55], %80 {strides = array<i32>} : memref<36x384xf32, #tpu.memory_space<vmem>>, vector<4x384xf32>,
    %c1_56 = arith.constant 1 : index
    %c0_57 = arith.constant 0 : index
    %c18_58 = arith.constant 18 : index
    %82 = vector.load %arg1[%c1_56, %c0_57, %c18_58] : memref<2x4x432xf32, #tpu.memory_space<vmem>>, vector<1x4x384xf32>
    %83 = vector.shape_cast %82 : vector<1x4x384xf32> to vector<4x384xf32>
    %84 = vector.extract_strided_slice %0 {offsets = [3, 0], sizes = [1, 384], strides = [1, 1]} : vector<10x384xf32> to vector<1x384xf32>
    %85 = vector.broadcast %84 : vector<1x384xf32> to vector<4x384xf32>
    %86 = arith.mulf %83, %85 : vector<4x384xf32>
    %c12_59 = arith.constant 12 : index
    %c0_60 = arith.constant 0 : index
    %87 = vector.load %arg6[%c12_59, %c0_60] : memref<36x384xf32, #tpu.memory_space<vmem>>, vector<4x384xf32>
    tpu.vector_store %arg6[%c12_59, %c0_60], %86 {strides = array<i32>} : memref<36x384xf32, #tpu.memory_space<vmem>>, vector<4x384xf32>,
    %c1_61 = arith.constant 1 : index
    %c0_62 = arith.constant 0 : index
    %c19_63 = arith.constant 19 : index
    %88 = vector.load %arg1[%c1_61, %c0_62, %c19_63] : memref<2x4x432xf32, #tpu.memory_space<vmem>>, vector<1x4x384xf32>
    %89 = vector.shape_cast %88 : vector<1x4x384xf32> to vector<4x384xf32>
    %90 = vector.extract_strided_slice %0 {offsets = [4, 0], sizes = [1, 384], strides = [1, 1]} : vector<10x384xf32> to vector<1x384xf32>
    %91 = vector.broadcast %90 : vector<1x384xf32> to vector<4x384xf32>
    %92 = arith.mulf %89, %91 : vector<4x384xf32>
    %c16_64 = arith.constant 16 : index
    %c0_65 = arith.constant 0 : index
    %93 = vector.load %arg6[%c16_64, %c0_65] : memref<36x384xf32, #tpu.memory_space<vmem>>, vector<4x384xf32>
    tpu.vector_store %arg6[%c16_64, %c0_65], %92 {strides = array<i32>} : memref<36x384xf32, #tpu.memory_space<vmem>>, vector<4x384xf32>,
    %c1_66 = arith.constant 1 : index
    %c0_67 = arith.constant 0 : index
    %c20_68 = arith.constant 20 : index
    %94 = vector.load %arg1[%c1_66, %c0_67, %c20_68] : memref<2x4x432xf32, #tpu.memory_space<vmem>>, vector<1x4x384xf32>
    %95 = vector.shape_cast %94 : vector<1x4x384xf32> to vector<4x384xf32>
    %96 = vector.extract_strided_slice %0 {offsets = [5, 0], sizes = [1, 384], strides = [1, 1]} : vector<10x384xf32> to vector<1x384xf32>
    %97 = vector.broadcast %96 : vector<1x384xf32> to vector<4x384xf32>
    %98 = arith.mulf %95, %97 : vector<4x384xf32>
    %c20_69 = arith.constant 20 : index
    %c0_70 = arith.constant 0 : index
    %99 = vector.load %arg6[%c20_69, %c0_70] : memref<36x384xf32, #tpu.memory_space<vmem>>, vector<4x384xf32>
    tpu.vector_store %arg6[%c20_69, %c0_70], %98 {strides = array<i32>} : memref<36x384xf32, #tpu.memory_space<vmem>>, vector<4x384xf32>,
    %c1_71 = arith.constant 1 : index
    %c0_72 = arith.constant 0 : index
    %c36_73 = arith.constant 36 : index
    %100 = vector.load %arg1[%c1_71, %c0_72, %c36_73] : memref<2x4x432xf32, #tpu.memory_space<vmem>>, vector<1x4x384xf32>
    %101 = vector.shape_cast %100 : vector<1x4x384xf32> to vector<4x384xf32>
    %102 = vector.extract_strided_slice %0 {offsets = [6, 0], sizes = [1, 384], strides = [1, 1]} : vector<10x384xf32> to vector<1x384xf32>
    %103 = vector.broadcast %102 : vector<1x384xf32> to vector<4x384xf32>
    %104 = arith.mulf %101, %103 : vector<4x384xf32>
    %c24_74 = arith.constant 24 : index
    %c0_75 = arith.constant 0 : index
    %105 = vector.load %arg6[%c24_74, %c0_75] : memref<36x384xf32, #tpu.memory_space<vmem>>, vector<4x384xf32>
    tpu.vector_store %arg6[%c24_74, %c0_75], %104 {strides = array<i32>} : memref<36x384xf32, #tpu.memory_space<vmem>>, vector<4x384xf32>,
    %c1_76 = arith.constant 1 : index
    %c0_77 = arith.constant 0 : index
    %c37_78 = arith.constant 37 : index
    %106 = vector.load %arg1[%c1_76, %c0_77, %c37_78] : memref<2x4x432xf32, #tpu.memory_space<vmem>>, vector<1x4x384xf32>
    %107 = vector.shape_cast %106 : vector<1x4x384xf32> to vector<4x384xf32>
    %108 = vector.extract_strided_slice %0 {offsets = [7, 0], sizes = [1, 384], strides = [1, 1]} : vector<10x384xf32> to vector<1x384xf32>
    %109 = vector.broadcast %108 : vector<1x384xf32> to vector<4x384xf32>
    %110 = arith.mulf %107, %109 : vector<4x384xf32>
    %c28_79 = arith.constant 28 : index
    %c0_80 = arith.constant 0 : index
    %111 = vector.load %arg6[%c28_79, %c0_80] : memref<36x384xf32, #tpu.memory_space<vmem>>, vector<4x384xf32>
    tpu.vector_store %arg6[%c28_79, %c0_80], %110 {strides = array<i32>} : memref<36x384xf32, #tpu.memory_space<vmem>>, vector<4x384xf32>,
    %c1_81 = arith.constant 1 : index
    %c0_82 = arith.constant 0 : index
    %c38_83 = arith.constant 38 : index
    %112 = vector.load %arg1[%c1_81, %c0_82, %c38_83] : memref<2x4x432xf32, #tpu.memory_space<vmem>>, vector<1x4x384xf32>
    %113 = vector.shape_cast %112 : vector<1x4x384xf32> to vector<4x384xf32>
    %114 = vector.extract_strided_slice %0 {offsets = [8, 0], sizes = [1, 384], strides = [1, 1]} : vector<10x384xf32> to vector<1x384xf32>
    %115 = vector.broadcast %114 : vector<1x384xf32> to vector<4x384xf32>
    %116 = arith.mulf %113, %115 : vector<4x384xf32>
    %c32_84 = arith.constant 32 : index
    %c0_85 = arith.constant 0 : index
    %117 = vector.load %arg6[%c32_84, %c0_85] : memref<36x384xf32, #tpu.memory_space<vmem>>, vector<4x384xf32>
    tpu.vector_store %arg6[%c32_84, %c0_85], %116 {strides = array<i32>} : memref<36x384xf32, #tpu.memory_space<vmem>>, vector<4x384xf32>,
    %c0_86 = arith.constant 0 : index
    %c0_87 = arith.constant 0 : index
    %118 = vector.load %arg6[%c0_86, %c0_87] : memref<36x384xf32, #tpu.memory_space<vmem>>, vector<36x384xf32>
    %cst_88 = arith.constant dense<0.000000e+00> : vector<8x384xf32>
    %119 = tpu.matmul %3, %118, %cst_88 {dimension_numbers = #tpu.dot_dimension_numbers<[1], [0], [0], [1], [0, 0, 1, 1], [], []>} : vector<8x36xf32>, vector<36x384xf32>, vector<8x384xf32> -> vector<8x384xf32>
    %120 = arith.addf %2, %119 : vector<8x384xf32>
    %c1_89 = arith.constant 1 : index
    %c0_90 = arith.constant 0 : index
    %c0_91 = arith.constant 0 : index
    %121 = vector.load %arg5[%c1_89, %c0_90, %c0_91] : memref<2x8x384xf32, #tpu.memory_space<vmem>>, vector<1x8x384xf32>
    %122 = vector.shape_cast %121 : vector<1x8x384xf32> to vector<8x384xf32>
    %123 = vector.shape_cast %120 : vector<8x384xf32> to vector<1x8x384xf32>
    tpu.vector_store %arg5[%c1_89, %c0_90, %c0_91], %123 {strides = array<i32>} : memref<2x8x384xf32, #tpu.memory_space<vmem>>, vector<1x8x384xf32>,
    return
  }
  func.func @transform_0(%arg0: i32) -> (i32, i32, i32) {
    %c0_i32 = arith.constant 0 : i32
    %c0_i32_0 = arith.constant 0 : i32
    %c0_i32_1 = arith.constant 0 : i32
    return %arg0, %c0_i32, %c0_i32_0 : i32, i32, i32
  }
  func.func @transform_1(%arg0: i32) -> (i32, i32) {
    %c0_i32 = arith.constant 0 : i32
    %c0_i32_0 = arith.constant 0 : i32
    %c0_i32_1 = arith.constant 0 : i32
    return %c0_i32, %c0_i32_0 : i32, i32
  }
  func.func @transform_2(%arg0: i32) -> (i32, i32) {
    %c0_i32 = arith.constant 0 : i32
    %c0_i32_0 = arith.constant 0 : i32
    %c0_i32_1 = arith.constant 0 : i32
    return %c0_i32, %c0_i32_0 : i32, i32
  }
  func.func @transform_3(%arg0: i32) -> (i32, i32) {
    %c0_i32 = arith.constant 0 : i32
    %c0_i32_0 = arith.constant 0 : i32
    %c0_i32_1 = arith.constant 0 : i32
    return %c0_i32, %c0_i32_0 : i32, i32
  }
  func.func @transform_4(%arg0: i32) -> (i32, i32, i32) {
    %c0_i32 = arith.constant 0 : i32
    %c0_i32_0 = arith.constant 0 : i32
    %c0_i32_1 = arith.constant 0 : i32
    return %arg0, %c0_i32, %c0_i32_0 : i32, i32, i32
  }
}

</mosaic_0001>

<llo_original>
// kernel: tpu_custom_call.1
$region0: #{tpu_custom_call.1}
  #allocation0 [shape = 'u32[]', space=smem, size = 0x4, offset = 0x4, fixed_abs, tag = 'smem constant byte address 0x4 - core index']
  #allocation1 [shape = 'u32[72,128]{1,0:T(1,128)}', space=vmem, size = 0x9000, scoped, tag = 'internal scratch']
  #allocation2 [shape = 'f32[36,384]{1,0:T(8,128)}', space=vmem, size = 0xf000, scoped, tag = 'scratch operand']
  %s0 = inlined_call_operand.hbm [shape: f32[2,4,432], index: 0, kind: input, shape index: {}]
  %s1 = inlined_call_operand.hbm [shape: f32[10,384], index: 1, kind: input, shape index: {}]
  %s2 = inlined_call_operand.hbm [shape: f32[8,10], index: 2, kind: input, shape index: {}]
  %s3 = inlined_call_operand.hbm [shape: f32[8,36], index: 3, kind: input, shape index: {}]
  %s4 = inlined_call_operand.hbm [shape: f32[2,8,384], index: 4, kind: output, shape index: {}]
  %s5 = sld [smem:[#allocation0]]
  $region42: #{tpu_custom_call.1} parent=0
    _
  %s7 = ssub.s32 1, %s5
  %s8 = scalar_select 0, %s7, %s5
  $region1: #{tpu_custom_call.1} parent=0
    #allocation3 [shape = 'u8[16384]{0}', space=vmem, size = 0x4000, scoped, tag = 'input window, operand 0, single buffered']
    #allocation4 [shape = 's32[1]{0}', space=sflag, size = 0x4, scoped, tag = 'scoped memory for tpu_custom_call.1']
    #allocation5 [shape = 's32[1]{0}', space=sflag, size = 0x4, scoped, tag = 'scoped memory for tpu_custom_call.1']
    #allocation6 [shape = 'u8[24576]{0}', space=vmem, size = 0x6000, scoped, tag = 'input window, operand 1, single buffered']
    #allocation7 [shape = 's32[1]{0}', space=sflag, size = 0x4, scoped, tag = 'scoped memory for tpu_custom_call.1']
    #allocation8 [shape = 'u8[4096]{0}', space=vmem, size = 0x1000, scoped, tag = 'input window, operand 2, single buffered']
    #allocation9 [shape = 'u8[4096]{0}', space=vmem, size = 0x1000, scoped, tag = 'input window, operand 3, single buffered']
    #allocation10 [shape = 's32[1]{0}', space=sflag, size = 0x4, scoped, tag = 'scoped memory for tpu_custom_call.1']
    #allocation11 [shape = 'u8[24576]{0}', space=vmem, size = 0x6000, scoped, tag = 'output window, operand 0, single buffered']
    %9 = vsyncpa [#allocation4], 0
    %10 = vsyncpa [#allocation7], 0
    %11 = vsyncpa [#allocation10], 0
    %12 = vsyncpa [#allocation5], 0
    // Predicated region
    $region2: #{tpu_custom_call.1} parent=1 // pred_check
      _
    $region3: #{tpu_custom_call.1} parent=1 // pred_check_branch
      %14 = sbr.rel (0) target = $region5
    $region4: #{tpu_custom_call.1} parent=1 // pred_region
      %16 = vsyncadd [#allocation4], 0
      %s17 = sshll.u32 %s0, 4
      %s18 = int_to_ptr.hbm [resolvable:$true] %s17
      %s19 = sshll.u32 [#allocation3], 4
      %s20 = int_to_ptr.vmem [resolvable:$true] %s19
      %25 = dma.hbm_to_vmem [thread:$0]  %s18, 512, %s20, [#allocation4], 256, 256, 16
    $region5: #{tpu_custom_call.1} parent=1 // pred_fallthru
      _
    // Predicated region
    $region6: #{tpu_custom_call.1} parent=1 // pred_check
      _
    $region7: #{tpu_custom_call.1} parent=1 // pred_check_branch
      %27 = sbr.rel (0) target = $region9
    $region8: #{tpu_custom_call.1} parent=1 // pred_region
      %29 = vsyncadd [#allocation7], 0
      %s30 = sshll.u32 %s1, 4
      %s31 = int_to_ptr.hbm [resolvable:$true] %s30
      %s32 = sshll.u32 [#allocation6], 4
      %s33 = int_to_ptr.vmem [resolvable:$true] %s32
      %38 = dma.hbm_to_vmem [thread:$0]  %s31, 768, %s33, [#allocation7], 384, 384, 24
    $region9: #{tpu_custom_call.1} parent=1 // pred_fallthru
      _
    // Predicated region
    $region10: #{tpu_custom_call.1} parent=1 // pred_check
      _
    $region11: #{tpu_custom_call.1} parent=1 // pred_check_branch
      %40 = sbr.rel (0) target = $region13
    $region12: #{tpu_custom_call.1} parent=1 // pred_region
      %42 = vsyncadd [#allocation7], 0
      %s44 = sshll.u32 %s2, 4
      %s45 = int_to_ptr.hbm [resolvable:$true] %s44
      %s46 = sshll.u32 [#allocation8], 4
      %s47 = int_to_ptr.vmem [resolvable:$true] %s46
      %49 = dma.hbm_to_vmem [thread:$0]  %s45, 128, %s47, [#allocation7]
    $region13: #{tpu_custom_call.1} parent=1 // pred_fallthru
      _
    // Predicated region
    $region14: #{tpu_custom_call.1} parent=1 // pred_check
      _
    $region15: #{tpu_custom_call.1} parent=1 // pred_check_branch
      %51 = sbr.rel (0) target = $region17
    $region16: #{tpu_custom_call.1} parent=1 // pred_region
      %53 = vsyncadd [#allocation10], 0
      %s55 = sshll.u32 %s3, 4
      %s56 = int_to_ptr.hbm [resolvable:$true] %s55
      %s57 = sshll.u32 [#allocation9], 4
      %s58 = int_to_ptr.vmem [resolvable:$true] %s57
      %60 = dma.hbm_to_vmem [thread:$0]  %s56, 128, %s58, [#allocation10]
    $region17: #{tpu_custom_call.1} parent=1 // pred_fallthru
      _
    // Predicated region
    $region18: #{tpu_custom_call.1} parent=1 // pred_check
      _
    $region19: #{tpu_custom_call.1} parent=1 // pred_check_branch
      %62 = sbr.rel (0) target = $region21
    $region20: #{tpu_custom_call.1} parent=1 // pred_region
      %64 = dma.done [#allocation4], 512
    $region21: #{tpu_custom_call.1} parent=1 // pred_fallthru
      _
    // Predicated region
    $region22: #{tpu_custom_call.1} parent=1 // pred_check
      _
    $region23: #{tpu_custom_call.1} parent=1 // pred_check_branch
      %66 = sbr.rel (0) target = $region25
    $region24: #{tpu_custom_call.1} parent=1 // pred_region
      %68 = dma.done [#allocation7], 768
    $region25: #{tpu_custom_call.1} parent=1 // pred_fallthru
      _
    // Predicated region
    $region26: #{tpu_custom_call.1} parent=1 // pred_check
      _
    $region27: #{tpu_custom_call.1} parent=1 // pred_check_branch
      %70 = sbr.rel (0) target = $region29
    $region28: #{tpu_custom_call.1} parent=1 // pred_region
      %72 = dma.done [#allocation7], 128
    $region29: #{tpu_custom_call.1} parent=1 // pred_fallthru
      _
    // Predicated region
    $region30: #{tpu_custom_call.1} parent=1 // pred_check
      _
    $region31: #{tpu_custom_call.1} parent=1 // pred_check_branch
      %74 = sbr.rel (0) target = $region33
    $region32: #{tpu_custom_call.1} parent=1 // pred_region
      %76 = dma.done [#allocation10], 128
    $region33: #{tpu_custom_call.1} parent=1 // pred_fallthru
      _
    %v77 = vld [vmem:[#allocation6] sm:$0xff]
    %v78 = vld [vmem:[#allocation6 + $0x8] sm:$0xff]
    %v79 = vld [vmem:[#allocation6 + $0x10] sm:$0xff]
    %v80 = vld [vmem:[#allocation6 + $0x18] sm:$0x3]
    %v81 = vld [vmem:[#allocation6 + $0x20] sm:$0x3]
    %v82 = vld [vmem:[#allocation6 + $0x28] sm:$0x3]
    %v83 = vld [vmem:[#allocation8] sm:$0xff]
    %vm84 = vcmask 80896
    %v86 = vsel %vm84, %v83, 0
    %vm88 = vcmask 1041408
    %v90 = vsel %vm88, %v80, 0
    %v93 = vsel %vm88, %v81, 0
    %v96 = vsel %vm88, %v82, 0
    %98 = vmatpush.msra.mxu0 0.0
    %99 = vmatpush.msra.mxu0 0.0
    %100 = vmatpush.msra.mxu0 0.0
    %101 = vmatpush.msra.mxu0 0.0
    %102 = vmatpush.msra.mxu0 0.0
    %103 = vmatpush.msra.mxu0 0.0
    %104 = vmatpush.msra.mxu0 0.0
    %105 = vmatpush.msra.mxu0 0.0
    %106 = vmatpush.msra.mxu0 0.0
    %107 = vmatpush.msra.mxu0 0.0
    %108 = vmatpush.msra.mxu0 0.0
    %109 = vmatpush.msra.mxu0 0.0
    %110 = vmatpush.msra.mxu0 0.0
    %111 = vmatpush.msra.mxu0 0.0
    %112 = vmatpush.msra.mxu0 %v90
    %113 = vmatpush.msra.mxu0 %v77
    %114 = vmatmul.f32.gmra.mxu0 %v86
    %v115 = vpop.f32.mrf.mxu0
    %v116 = vadd.f32 0.0, %v115
    %117 = vdwg.mxu0
    %118 = vmatpush.msra.mxu0 0.0
    %119 = vmatpush.msra.mxu0 0.0
    %120 = vmatpush.msra.mxu0 0.0
    %121 = vmatpush.msra.mxu0 0.0
    %122 = vmatpush.msra.mxu0 0.0
    %123 = vmatpush.msra.mxu0 0.0
    %124 = vmatpush.msra.mxu0 0.0
    %125 = vmatpush.msra.mxu0 0.0
    %126 = vmatpush.msra.mxu0 0.0
    %127 = vmatpush.msra.mxu0 0.0
    %128 = vmatpush.msra.mxu0 0.0
    %129 = vmatpush.msra.mxu0 0.0
    %130 = vmatpush.msra.mxu0 0.0
    %131 = vmatpush.msra.mxu0 0.0
    %132 = vmatpush.msra.mxu0 %v93
    %133 = vmatpush.msra.mxu0 %v78
    %134 = vmatmul.f32.gmra.mxu0 %v86
    %v135 = vpop.f32.mrf.mxu0
    %v136 = vadd.f32 0.0, %v135
    %137 = vdwg.mxu0
    %138 = vmatpush.msra.mxu0 0.0
    %139 = vmatpush.msra.mxu0 0.0
    %140 = vmatpush.msra.mxu0 0.0
    %141 = vmatpush.msra.mxu0 0.0
    %142 = vmatpush.msra.mxu0 0.0
    %143 = vmatpush.msra.mxu0 0.0
    %144 = vmatpush.msra.mxu0 0.0
    %145 = vmatpush.msra.mxu0 0.0
    %146 = vmatpush.msra.mxu0 0.0
    %147 = vmatpush.msra.mxu0 0.0
    %148 = vmatpush.msra.mxu0 0.0
    %149 = vmatpush.msra.mxu0 0.0
    %150 = vmatpush.msra.mxu0 0.0
    %151 = vmatpush.msra.mxu0 0.0
    %152 = vmatpush.msra.mxu0 %v96
    %153 = vmatpush.msra.mxu0 %v79
    %154 = vmatmul.f32.gmra.mxu0 %v86
    %v155 = vpop.f32.mrf.mxu0
    %v156 = vadd.f32 0.0, %v155
    %157 = vdwg.mxu0
    %v158 = vld [vmem:[#allocation9] sm:$0xff]
    %v159 = vld [vmem:[#allocation3] sm:$0xff]
    %v160 = vld [vmem:[#allocation3 + $0x8] sm:$0xf]
    %v161 = vperm.slane %v77, 0
    %v162 = vperm.slane %v78, 0
    %v163 = vperm.slane %v79, 0
    %v166 = vrot.slane %v162, 4
    %vm167 = vcmask 1043456
    %v168 = vsel %vm167, %v161, %v166
    %v170 = vmul.f32 %v159, %v168
    %v171 = vmul.f32 %v160, %v163
    %174 = vst [vmem:[#allocation1] ss:$2 sm:$0xff] %v170
    %s175 = scalar_lea.vmem [#allocation1], 16
    %176 = vst [vmem:[%s175] ss:$2 sm:$0xff] %v171
    %v177 = vld.sshfl [vmem:[#allocation1] sm:$0xff pattern:$0x75316420]
    %v178 = vld.sshfl [vmem:[#allocation1 + $0x8] sm:$0xff pattern:$0x75316420]
    %v179 = vld.sshfl [vmem:[#allocation1 + $0x10] sm:$0xff pattern:$0x75316420]
    %183 = vst [vmem:[#allocation2] sm:$0xf] %v177
    %184 = vst [vmem:[#allocation2 + $0x8] sm:$0xf] %v178
    %185 = vst [vmem:[#allocation2 + $0x10] sm:$0xf] %v179
    %v186 = vld [vmem:[#allocation3] sm:$0xff]
    %v187 = vld [vmem:[#allocation3 + $0x8] sm:$0xff]
    %v188 = vperm.slane %v77, 1
    %v189 = vperm.slane %v78, 1
    %v190 = vperm.slane %v79, 1
    %v194 = vrot.slane %v189, 4
    %v195 = vsel %vm167, %v188, %v194
    %196 = vrot.lane.b32.xlu0 %v195, 1
    %v197 = vpop.permute.xlu0 %196
    %198 = vrot.lane.b32.xlu0 %v190, 1
    %v199 = vpop.permute.xlu0 %198
    %v200 = vrot.slane %v197, 4
    %v201 = vrot.slane %v199, 4
    %vm202 = vcmask 7168
    %v203 = vsel %vm202, %v200, %v197
    %v204 = vsel %vm167, %v200, %v201
    %v205 = vsel %vm202, %v204, %v199
    %v208 = vmul.f32 %v186, %v203
    %v209 = vmul.f32 %v187, %v205
    %s212 = scalar_lea.vmem [#allocation1], 1
    %213 = vst [vmem:[%s212] ss:$2 sm:$0xff] %v208
    %s214 = scalar_lea.vmem [#allocation1], 17
    %215 = vst [vmem:[%s214] ss:$2 sm:$0xff] %v209
    %v216 = vld.sshfl [vmem:[#allocation1] sm:$0xff pattern:$0x75316420]
    %v217 = vld.sshfl [vmem:[#allocation1 + $0x8] sm:$0xff pattern:$0x75316420]
    %v218 = vld.sshfl [vmem:[#allocation1 + $0x10] sm:$0xff pattern:$0x75316420]
    %v219 = vld.sshfl [vmem:[#allocation1 + $0x18] sm:$0xff pattern:$0x75316420]
    %220 = vrot.lane.b32.xlu0 %v216, 127
    %v221 = vpop.permute.xlu0 %220
    %222 = vrot.lane.b32.xlu0 %v217, 127
    %v223 = vpop.permute.xlu0 %222
    %224 = vrot.lane.b32.xlu0 %v218, 127
    %v225 = vpop.permute.xlu0 %224
    %226 = vrot.lane.b32.xlu0 %v219, 127
    %v227 = vpop.permute.xlu0 %226
    %vm228 = vcmask 1039360
    %v229 = vsel %vm228, %v221, %v223
    %v230 = vsel %vm228, %v223, %v225
    %v231 = vsel %vm228, %v225, %v227
    %235 = vst [vmem:[#allocation2] sm:$0xf0] %v229
    %236 = vst [vmem:[#allocation2 + $0x8] sm:$0xf0] %v230
    %237 = vst [vmem:[#allocation2 + $0x10] sm:$0xf0] %v231
    %v238 = vld [vmem:[#allocation3] sm:$0xff]
    %v239 = vld [vmem:[#allocation3 + $0x8] sm:$0xff]
    %v240 = vperm.slane %v77, 2
    %v241 = vperm.slane %v78, 2
    %v242 = vperm.slane %v79, 2
    %v246 = vrot.slane %v241, 4
    %v247 = vsel %vm167, %v240, %v246
    %248 = vrot.lane.b32.xlu0 %v247, 2
    %v249 = vpop.permute.xlu0 %248
    %250 = vrot.lane.b32.xlu0 %v242, 2
    %v251 = vpop.permute.xlu0 %250
    %v252 = vrot.slane %v249, 4
    %v253 = vrot.slane %v251, 4
    %vm254 = vcmask 15360
    %v255 = vsel %vm254, %v252, %v249
    %v256 = vsel %vm167, %v252, %v253
    %v257 = vsel %vm254, %v256, %v251
    %v260 = vmul.f32 %v238, %v255
    %v261 = vmul.f32 %v239, %v257
    %264 = vst [vmem:[#allocation1] ss:$2 sm:$0xff] %v260
    %s265 = scalar_lea.vmem [#allocation1], 16
    %266 = vst [vmem:[%s265] ss:$2 sm:$0xff] %v261
    %v267 = vld.sshfl [vmem:[#allocation1] sm:$0xff pattern:$0x75316420]
    %v268 = vld.sshfl [vmem:[#allocation1 + $0x8] sm:$0xff pattern:$0x75316420]
    %v269 = vld.sshfl [vmem:[#allocation1 + $0x10] sm:$0xff pattern:$0x75316420]
    %v270 = vld.sshfl [vmem:[#allocation1 + $0x18] sm:$0xff pattern:$0x75316420]
    %271 = vrot.lane.b32.xlu0 %v267, 126
    %v272 = vpop.permute.xlu0 %271
    %273 = vrot.lane.b32.xlu0 %v268, 126
    %v274 = vpop.permute.xlu0 %273
    %275 = vrot.lane.b32.xlu0 %v269, 126
    %v276 = vpop.permute.xlu0 %275
    %277 = vrot.lane.b32.xlu0 %v270, 126
    %v278 = vpop.permute.xlu0 %277
    %vm279 = vcmask 1031168
    %v280 = vsel %vm279, %v272, %v274
    %v281 = vsel %vm279, %v274, %v276
    %v282 = vsel %vm279, %v276, %v278
    %286 = vst [vmem:[#allocation2 + $0x18] sm:$0xf] %v280
    %287 = vst [vmem:[#allocation2 + $0x20] sm:$0xf] %v281
    %288 = vst [vmem:[#allocation2 + $0x28] sm:$0xf] %v282
    %v289 = vld [vmem:[#allocation3] sm:$0xff]
    %v290 = vld [vmem:[#allocation3 + $0x8] sm:$0xff]
    %v291 = vperm.slane %v77, 3
    %v292 = vperm.slane %v78, 3
    %v293 = vperm.slane %v79, 3
    %v297 = vrot.slane %v292, 4
    %v298 = vsel %vm167, %v291, %v297
    %299 = vrot.lane.b32.xlu0 %v298, 18
    %v300 = vpop.permute.xlu0 %299
    %301 = vrot.lane.b32.xlu0 %v293, 18
    %v302 = vpop.permute.xlu0 %301
    %v303 = vrot.slane %v300, 4
    %v304 = vrot.slane %v302, 4
    %vm305 = vcmask 146432
    %v306 = vsel %vm305, %v303, %v300
    %v307 = vsel %vm167, %v303, %v304
    %v308 = vsel %vm305, %v307, %v302
    %v311 = vmul.f32 %v289, %v306
    %v312 = vmul.f32 %v290, %v308
    %s315 = scalar_lea.vmem [#allocation1], 1
    %316 = vst [vmem:[%s315] ss:$2 sm:$0xff] %v311
    %s317 = scalar_lea.vmem [#allocation1], 17
    %318 = vst [vmem:[%s317] ss:$2 sm:$0xff] %v312
    %v319 = vld.sshfl [vmem:[#allocation1] sm:$0xff pattern:$0x75316420]
    %v320 = vld.sshfl [vmem:[#allocation1 + $0x8] sm:$0xff pattern:$0x75316420]
    %v321 = vld.sshfl [vmem:[#allocation1 + $0x10] sm:$0xff pattern:$0x75316420]
    %v322 = vld.sshfl [vmem:[#allocation1 + $0x18] sm:$0xff pattern:$0x75316420]
    %323 = vrot.lane.b32.xlu0 %v319, 110
    %v324 = vpop.permute.xlu0 %323
    %325 = vrot.lane.b32.xlu0 %v320, 110
    %v326 = vpop.permute.xlu0 %325
    %327 = vrot.lane.b32.xlu0 %v321, 110
    %v328 = vpop.permute.xlu0 %327
    %329 = vrot.lane.b32.xlu0 %v322, 110
    %v330 = vpop.permute.xlu0 %329
    %vm331 = vcmask 900096
    %v332 = vsel %vm331, %v324, %v326
    %v333 = vsel %vm331, %v326, %v328
    %v334 = vsel %vm331, %v328, %v330
    %338 = vst [vmem:[#allocation2 + $0x18] sm:$0xf0] %v332
    %339 = vst [vmem:[#allocation2 + $0x20] sm:$0xf0] %v333
    %340 = vst [vmem:[#allocation2 + $0x28] sm:$0xf0] %v334
    %v341 = vld [vmem:[#allocation3] sm:$0xff]
    %v342 = vld [vmem:[#allocation3 + $0x8] sm:$0xff]
    %v343 = vperm.slane %v77, 4
    %v344 = vperm.slane %v78, 4
    %v345 = vperm.slane %v79, 4
    %v349 = vrot.slane %v344, 4
    %v350 = vsel %vm167, %v343, %v349
    %351 = vrot.lane.b32.xlu0 %v350, 19
    %v352 = vpop.permute.xlu0 %351
    %353 = vrot.lane.b32.xlu0 %v345, 19
    %v354 = vpop.permute.xlu0 %353
    %v355 = vrot.slane %v352, 4
    %v356 = vrot.slane %v354, 4
    %vm357 = vcmask 154624
    %v358 = vsel %vm357, %v355, %v352
    %v359 = vsel %vm167, %v355, %v356
    %v360 = vsel %vm357, %v359, %v354
    %v363 = vmul.f32 %v341, %v358
    %v364 = vmul.f32 %v342, %v360
    %367 = vst [vmem:[#allocation1] ss:$2 sm:$0xff] %v363
    %s368 = scalar_lea.vmem [#allocation1], 16
    %369 = vst [vmem:[%s368] ss:$2 sm:$0xff] %v364
    %v370 = vld.sshfl [vmem:[#allocation1] sm:$0xff pattern:$0x75316420]
    %v371 = vld.sshfl [vmem:[#allocation1 + $0x8] sm:$0xff pattern:$0x75316420]
    %v372 = vld.sshfl [vmem:[#allocation1 + $0x10] sm:$0xff pattern:$0x75316420]
    %v373 = vld.sshfl [vmem:[#allocation1 + $0x18] sm:$0xff pattern:$0x75316420]
    %374 = vrot.lane.b32.xlu0 %v370, 109
    %v375 = vpop.permute.xlu0 %374
    %376 = vrot.lane.b32.xlu0 %v371, 109
    %v377 = vpop.permute.xlu0 %376
    %378 = vrot.lane.b32.xlu0 %v372, 109
    %v379 = vpop.permute.xlu0 %378
    %380 = vrot.lane.b32.xlu0 %v373, 109
    %v381 = vpop.permute.xlu0 %380
    %vm382 = vcmask 891904
    %v383 = vsel %vm382, %v375, %v377
    %v384 = vsel %vm382, %v377, %v379
    %v385 = vsel %vm382, %v379, %v381
    %389 = vst [vmem:[#allocation2 + $0x30] sm:$0xf] %v383
    %390 = vst [vmem:[#allocation2 + $0x38] sm:$0xf] %v384
    %391 = vst [vmem:[#allocation2 + $0x40] sm:$0xf] %v385
    %v392 = vld [vmem:[#allocation3] sm:$0xff]
    %v393 = vld [vmem:[#allocation3 + $0x8] sm:$0xff]
    %v394 = vperm.slane %v77, 5
    %v395 = vperm.slane %v78, 5
    %v396 = vperm.slane %v79, 5
    %v400 = vrot.slane %v395, 4
    %v401 = vsel %vm167, %v394, %v400
    %402 = vrot.lane.b32.xlu0 %v401, 20
    %v403 = vpop.permute.xlu0 %402
    %404 = vrot.lane.b32.xlu0 %v396, 20
    %v405 = vpop.permute.xlu0 %404
    %v406 = vrot.slane %v403, 4
    %v407 = vrot.slane %v405, 4
    %vm408 = vcmask 162816
    %v409 = vsel %vm408, %v406, %v403
    %v410 = vsel %vm167, %v406, %v407
    %v411 = vsel %vm408, %v410, %v405
    %v414 = vmul.f32 %v392, %v409
    %v415 = vmul.f32 %v393, %v411
    %s418 = scalar_lea.vmem [#allocation1], 1
    %419 = vst [vmem:[%s418] ss:$2 sm:$0xff] %v414
    %s420 = scalar_lea.vmem [#allocation1], 17
    %421 = vst [vmem:[%s420] ss:$2 sm:$0xff] %v415
    %v422 = vld.sshfl [vmem:[#allocation1] sm:$0xff pattern:$0x75316420]
    %v423 = vld.sshfl [vmem:[#allocation1 + $0x8] sm:$0xff pattern:$0x75316420]
    %v424 = vld.sshfl [vmem:[#allocation1 + $0x10] sm:$0xff pattern:$0x75316420]
    %v425 = vld.sshfl [vmem:[#allocation1 + $0x18] sm:$0xff pattern:$0x75316420]
    %426 = vrot.lane.b32.xlu0 %v422, 108
    %v427 = vpop.permute.xlu0 %426
    %428 = vrot.lane.b32.xlu0 %v423, 108
    %v429 = vpop.permute.xlu0 %428
    %430 = vrot.lane.b32.xlu0 %v424, 108
    %v431 = vpop.permute.xlu0 %430
    %432 = vrot.lane.b32.xlu0 %v425, 108
    %v433 = vpop.permute.xlu0 %432
    %vm434 = vcmask 883712
    %v435 = vsel %vm434, %v427, %v429
    %v436 = vsel %vm434, %v429, %v431
    %v437 = vsel %vm434, %v431, %v433
    %441 = vst [vmem:[#allocation2 + $0x30] sm:$0xf0] %v435
    %442 = vst [vmem:[#allocation2 + $0x38] sm:$0xf0] %v436
    %443 = vst [vmem:[#allocation2 + $0x40] sm:$0xf0] %v437
    %v444 = vld [vmem:[#allocation3] sm:$0xff]
    %v445 = vld [vmem:[#allocation3 + $0x8] sm:$0xff]
    %v446 = vperm.slane %v77, 6
    %v447 = vperm.slane %v78, 6
    %v448 = vperm.slane %v79, 6
    %v452 = vrot.slane %v447, 4
    %v453 = vsel %vm167, %v446, %v452
    %454 = vrot.lane.b32.xlu0 %v453, 36
    %v455 = vpop.permute.xlu0 %454
    %456 = vrot.lane.b32.xlu0 %v448, 36
    %v457 = vpop.permute.xlu0 %456
    %v458 = vrot.slane %v455, 4
    %v459 = vrot.slane %v457, 4
    %vm460 = vcmask 293888
    %v461 = vsel %vm460, %v458, %v455
    %v462 = vsel %vm167, %v458, %v459
    %v463 = vsel %vm460, %v462, %v457
    %v466 = vmul.f32 %v444, %v461
    %v467 = vmul.f32 %v445, %v463
    %470 = vst [vmem:[#allocation1] ss:$2 sm:$0xff] %v466
    %s471 = scalar_lea.vmem [#allocation1], 16
    %472 = vst [vmem:[%s471] ss:$2 sm:$0xff] %v467
    %v473 = vld.sshfl [vmem:[#allocation1] sm:$0xff pattern:$0x75316420]
    %v474 = vld.sshfl [vmem:[#allocation1 + $0x8] sm:$0xff pattern:$0x75316420]
    %v475 = vld.sshfl [vmem:[#allocation1 + $0x10] sm:$0xff pattern:$0x75316420]
    %v476 = vld.sshfl [vmem:[#allocation1 + $0x18] sm:$0xff pattern:$0x75316420]
    %477 = vrot.lane.b32.xlu0 %v473, 92
    %v478 = vpop.permute.xlu0 %477
    %479 = vrot.lane.b32.xlu0 %v474, 92
    %v480 = vpop.permute.xlu0 %479
    %481 = vrot.lane.b32.xlu0 %v475, 92
    %v482 = vpop.permute.xlu0 %481
    %483 = vrot.lane.b32.xlu0 %v476, 92
    %v484 = vpop.permute.xlu0 %483
    %vm485 = vcmask 752640
    %v486 = vsel %vm485, %v478, %v480
    %v487 = vsel %vm485, %v480, %v482
    %v488 = vsel %vm485, %v482, %v484
    %492 = vst [vmem:[#allocation2 + $0x48] sm:$0xf] %v486
    %493 = vst [vmem:[#allocation2 + $0x50] sm:$0xf] %v487
    %494 = vst [vmem:[#allocation2 + $0x58] sm:$0xf] %v488
    %v495 = vld [vmem:[#allocation3] sm:$0xff]
    %v496 = vld [vmem:[#allocation3 + $0x8] sm:$0xff]
    %v497 = vperm.slane %v77, 7
    %v498 = vperm.slane %v78, 7
    %v499 = vperm.slane %v79, 7
    %v503 = vrot.slane %v498, 4
    %v504 = vsel %vm167, %v497, %v503
    %505 = vrot.lane.b32.xlu0 %v504, 37
    %v506 = vpop.permute.xlu0 %505
    %507 = vrot.lane.b32.xlu0 %v499, 37
    %v508 = vpop.permute.xlu0 %507
    %v509 = vrot.slane %v506, 4
    %v510 = vrot.slane %v508, 4
    %vm511 = vcmask 302080
    %v512 = vsel %vm511, %v509, %v506
    %v513 = vsel %vm167, %v509, %v510
    %v514 = vsel %vm511, %v513, %v508
    %v517 = vmul.f32 %v495, %v512
    %v518 = vmul.f32 %v496, %v514
    %s521 = scalar_lea.vmem [#allocation1], 1
    %522 = vst [vmem:[%s521] ss:$2 sm:$0xff] %v517
    %s523 = scalar_lea.vmem [#allocation1], 17
    %524 = vst [vmem:[%s523] ss:$2 sm:$0xff] %v518
    %v525 = vld.sshfl [vmem:[#allocation1] sm:$0xff pattern:$0x75316420]
    %v526 = vld.sshfl [vmem:[#allocation1 + $0x8] sm:$0xff pattern:$0x75316420]
    %v527 = vld.sshfl [vmem:[#allocation1 + $0x10] sm:$0xff pattern:$0x75316420]
    %v528 = vld.sshfl [vmem:[#allocation1 + $0x18] sm:$0xff pattern:$0x75316420]
    %529 = vrot.lane.b32.xlu0 %v525, 91
    %v530 = vpop.permute.xlu0 %529
    %531 = vrot.lane.b32.xlu0 %v526, 91
    %v532 = vpop.permute.xlu0 %531
    %533 = vrot.lane.b32.xlu0 %v527, 91
    %v534 = vpop.permute.xlu0 %533
    %535 = vrot.lane.b32.xlu0 %v528, 91
    %v536 = vpop.permute.xlu0 %535
    %vm537 = vcmask 744448
    %v538 = vsel %vm537, %v530, %v532
    %v539 = vsel %vm537, %v532, %v534
    %v540 = vsel %vm537, %v534, %v536
    %544 = vst [vmem:[#allocation2 + $0x48] sm:$0xf0] %v538
    %545 = vst [vmem:[#allocation2 + $0x50] sm:$0xf0] %v539
    %546 = vst [vmem:[#allocation2 + $0x58] sm:$0xf0] %v540
    %v547 = vld [vmem:[#allocation3] sm:$0xff]
    %v548 = vld [vmem:[#allocation3 + $0x8] sm:$0xff]
    %v549 = vperm.slane %v80, 0
    %v550 = vperm.slane %v81, 0
    %v551 = vperm.slane %v82, 0
    %v555 = vrot.slane %v550, 4
    %v556 = vsel %vm167, %v549, %v555
    %557 = vrot.lane.b32.xlu0 %v556, 38
    %v558 = vpop.permute.xlu0 %557
    %559 = vrot.lane.b32.xlu0 %v551, 38
    %v560 = vpop.permute.xlu0 %559
    %v561 = vrot.slane %v558, 4
    %v562 = vrot.slane %v560, 4
    %vm563 = vcmask 310272
    %v564 = vsel %vm563, %v561, %v558
    %v565 = vsel %vm167, %v561, %v562
    %v566 = vsel %vm563, %v565, %v560
    %v569 = vmul.f32 %v547, %v564
    %v570 = vmul.f32 %v548, %v566
    %573 = vst [vmem:[#allocation1] ss:$2 sm:$0xff] %v569
    %s574 = scalar_lea.vmem [#allocation1], 16
    %575 = vst [vmem:[%s574] ss:$2 sm:$0xff] %v570
    %v576 = vld.sshfl [vmem:[#allocation1] sm:$0xff pattern:$0x75316420]
    %v577 = vld.sshfl [vmem:[#allocation1 + $0x8] sm:$0xff pattern:$0x75316420]
    %v578 = vld.sshfl [vmem:[#allocation1 + $0x10] sm:$0xff pattern:$0x75316420]
    %v579 = vld.sshfl [vmem:[#allocation1 + $0x18] sm:$0xff pattern:$0x75316420]
    %580 = vrot.lane.b32.xlu0 %v576, 90
    %v581 = vpop.permute.xlu0 %580
    %582 = vrot.lane.b32.xlu0 %v577, 90
    %v583 = vpop.permute.xlu0 %582
    %584 = vrot.lane.b32.xlu0 %v578, 90
    %v585 = vpop.permute.xlu0 %584
    %586 = vrot.lane.b32.xlu0 %v579, 90
    %v587 = vpop.permute.xlu0 %586
    %vm588 = vcmask 736256
    %v589 = vsel %vm588, %v581, %v583
    %v590 = vsel %vm588, %v583, %v585
    %v591 = vsel %vm588, %v585, %v587
    %595 = vst [vmem:[#allocation2 + $0x60] sm:$0xf] %v589
    %596 = vst [vmem:[#allocation2 + $0x68] sm:$0xf] %v590
    %597 = vst [vmem:[#allocation2 + $0x70] sm:$0xf] %v591
    %v598 = vld [vmem:[#allocation2] sm:$0xff]
    %v599 = vld [vmem:[#allocation2 + $0x8] sm:$0xff]
    %v600 = vld [vmem:[#allocation2 + $0x10] sm:$0xff]
    %v601 = vld [vmem:[#allocation2 + $0x18] sm:$0xff]
    %v602 = vld [vmem:[#allocation2 + $0x20] sm:$0xff]
    %v603 = vld [vmem:[#allocation2 + $0x28] sm:$0xff]
    %v604 = vld [vmem:[#allocation2 + $0x30] sm:$0xff]
    %v605 = vld [vmem:[#allocation2 + $0x38] sm:$0xff]
    %v606 = vld [vmem:[#allocation2 + $0x40] sm:$0xff]
    %v607 = vld [vmem:[#allocation2 + $0x48] sm:$0xff]
    %v608 = vld [vmem:[#allocation2 + $0x50] sm:$0xff]
    %v609 = vld [vmem:[#allocation2 + $0x58] sm:$0xff]
    %v610 = vld [vmem:[#allocation2 + $0x60] sm:$0xf]
    %v611 = vld [vmem:[#allocation2 + $0x68] sm:$0xf]
    %v612 = vld [vmem:[#allocation2 + $0x70] sm:$0xf]
    %v614 = vsel %vm460, %v158, 0
    %v617 = vsel %vm167, %v610, 0
    %v620 = vsel %vm167, %v611, 0
    %v623 = vsel %vm167, %v612, 0
    %625 = vmatpush.msra.mxu0 0.0
    %626 = vmatpush.msra.mxu0 0.0
    %627 = vmatpush.msra.mxu0 0.0
    %628 = vmatpush.msra.mxu0 0.0
    %629 = vmatpush.msra.mxu0 0.0
    %630 = vmatpush.msra.mxu0 0.0
    %631 = vmatpush.msra.mxu0 0.0
    %632 = vmatpush.msra.mxu0 0.0
    %633 = vmatpush.msra.mxu0 0.0
    %634 = vmatpush.msra.mxu0 0.0
    %635 = vmatpush.msra.mxu0 0.0
    %636 = vmatpush.msra.mxu0 %v617
    %637 = vmatpush.msra.mxu0 %v607
    %638 = vmatpush.msra.mxu0 %v604
    %639 = vmatpush.msra.mxu0 %v601
    %640 = vmatpush.msra.mxu0 %v598
    %641 = vmatmul.f32.gmra.mxu0 %v614
    %v642 = vpop.f32.mrf.mxu0
    %v643 = vadd.f32 0.0, %v642
    %644 = vdwg.mxu0
    %645 = vmatpush.msra.mxu0 0.0
    %646 = vmatpush.msra.mxu0 0.0
    %647 = vmatpush.msra.mxu0 0.0
    %648 = vmatpush.msra.mxu0 0.0
    %649 = vmatpush.msra.mxu0 0.0
    %650 = vmatpush.msra.mxu0 0.0
    %651 = vmatpush.msra.mxu0 0.0
    %652 = vmatpush.msra.mxu0 0.0
    %653 = vmatpush.msra.mxu0 0.0
    %654 = vmatpush.msra.mxu0 0.0
    %655 = vmatpush.msra.mxu0 0.0
    %656 = vmatpush.msra.mxu0 %v620
    %657 = vmatpush.msra.mxu0 %v608
    %658 = vmatpush.msra.mxu0 %v605
    %659 = vmatpush.msra.mxu0 %v602
    %660 = vmatpush.msra.mxu0 %v599
    %661 = vmatmul.f32.gmra.mxu0 %v614
    %v662 = vpop.f32.mrf.mxu0
    %v663 = vadd.f32 0.0, %v662
    %664 = vdwg.mxu0
    %665 = vmatpush.msra.mxu0 0.0
    %666 = vmatpush.msra.mxu0 0.0
    %667 = vmatpush.msra.mxu0 0.0
    %668 = vmatpush.msra.mxu0 0.0
    %669 = vmatpush.msra.mxu0 0.0
    %670 = vmatpush.msra.mxu0 0.0
    %671 = vmatpush.msra.mxu0 0.0
    %672 = vmatpush.msra.mxu0 0.0
    %673 = vmatpush.msra.mxu0 0.0
    %674 = vmatpush.msra.mxu0 0.0
    %675 = vmatpush.msra.mxu0 0.0
    %676 = vmatpush.msra.mxu0 %v623
    %677 = vmatpush.msra.mxu0 %v609
    %678 = vmatpush.msra.mxu0 %v606
    %679 = vmatpush.msra.mxu0 %v603
    %680 = vmatpush.msra.mxu0 %v600
    %681 = vmatmul.f32.gmra.mxu0 %v614
    %v682 = vpop.f32.mrf.mxu0
    %v683 = vadd.f32 0.0, %v682
    %684 = vdwg.mxu0
    %v685 = vadd.f32 %v116, %v643
    %v686 = vadd.f32 %v136, %v663
    %v687 = vadd.f32 %v156, %v683
    %688 = vst [vmem:[#allocation11] sm:$0xff] %v685
    %689 = vst [vmem:[#allocation11 + $0x8] sm:$0xff] %v686
    %690 = vst [vmem:[#allocation11 + $0x10] sm:$0xff] %v687
    %s691 = scalar_lea.vmem [#allocation3], 16
    %v692 = vld [vmem:[%s691] sm:$0xff]
    %v693 = vld [vmem:[%s691 + $0x8] sm:$0xf]
    %v694 = vmul.f32 %v692, %v168
    %v695 = vmul.f32 %v693, %v163
    %698 = vst [vmem:[#allocation1] ss:$2 sm:$0xff] %v694
    %s699 = scalar_lea.vmem [#allocation1], 16
    %700 = vst [vmem:[%s699] ss:$2 sm:$0xff] %v695
    %v701 = vld.sshfl [vmem:[#allocation1] sm:$0xff pattern:$0x75316420]
    %v702 = vld.sshfl [vmem:[#allocation1 + $0x8] sm:$0xff pattern:$0x75316420]
    %v703 = vld.sshfl [vmem:[#allocation1 + $0x10] sm:$0xff pattern:$0x75316420]
    %707 = vst [vmem:[#allocation2] sm:$0xf] %v701
    %708 = vst [vmem:[#allocation2 + $0x8] sm:$0xf] %v702
    %709 = vst [vmem:[#allocation2 + $0x10] sm:$0xf] %v703
    %v710 = vld [vmem:[%s691] sm:$0xff]
    %v711 = vld [vmem:[%s691 + $0x8] sm:$0xff]
    %v712 = vmul.f32 %v710, %v203
    %v713 = vmul.f32 %v711, %v205
    %s716 = scalar_lea.vmem [#allocation1], 1
    %717 = vst [vmem:[%s716] ss:$2 sm:$0xff] %v712
    %s718 = scalar_lea.vmem [#allocation1], 17
    %719 = vst [vmem:[%s718] ss:$2 sm:$0xff] %v713
    %v720 = vld.sshfl [vmem:[#allocation1] sm:$0xff pattern:$0x75316420]
    %v721 = vld.sshfl [vmem:[#allocation1 + $0x8] sm:$0xff pattern:$0x75316420]
    %v722 = vld.sshfl [vmem:[#allocation1 + $0x10] sm:$0xff pattern:$0x75316420]
    %v723 = vld.sshfl [vmem:[#allocation1 + $0x18] sm:$0xff pattern:$0x75316420]
    %724 = vrot.lane.b32.xlu0 %v720, 127
    %v725 = vpop.permute.xlu0 %724
    %726 = vrot.lane.b32.xlu0 %v721, 127
    %v727 = vpop.permute.xlu0 %726
    %728 = vrot.lane.b32.xlu0 %v722, 127
    %v729 = vpop.permute.xlu0 %728
    %730 = vrot.lane.b32.xlu0 %v723, 127
    %v731 = vpop.permute.xlu0 %730
    %v732 = vsel %vm228, %v725, %v727
    %v733 = vsel %vm228, %v727, %v729
    %v734 = vsel %vm228, %v729, %v731
    %738 = vst [vmem:[#allocation2] sm:$0xf0] %v732
    %739 = vst [vmem:[#allocation2 + $0x8] sm:$0xf0] %v733
    %740 = vst [vmem:[#allocation2 + $0x10] sm:$0xf0] %v734
    %v741 = vld [vmem:[%s691] sm:$0xff]
    %v742 = vld [vmem:[%s691 + $0x8] sm:$0xff]
    %v743 = vmul.f32 %v741, %v255
    %v744 = vmul.f32 %v742, %v257
    %747 = vst [vmem:[#allocation1] ss:$2 sm:$0xff] %v743
    %s748 = scalar_lea.vmem [#allocation1], 16
    %749 = vst [vmem:[%s748] ss:$2 sm:$0xff] %v744
    %v750 = vld.sshfl [vmem:[#allocation1] sm:$0xff pattern:$0x75316420]
    %v751 = vld.sshfl [vmem:[#allocation1 + $0x8] sm:$0xff pattern:$0x75316420]
    %v752 = vld.sshfl [vmem:[#allocation1 + $0x10] sm:$0xff pattern:$0x75316420]
    %v753 = vld.sshfl [vmem:[#allocation1 + $0x18] sm:$0xff pattern:$0x75316420]
    %754 = vrot.lane.b32.xlu0 %v750, 126
    %v755 = vpop.permute.xlu0 %754
    %756 = vrot.lane.b32.xlu0 %v751, 126
    %v757 = vpop.permute.xlu0 %756
    %758 = vrot.lane.b32.xlu0 %v752, 126
    %v759 = vpop.permute.xlu0 %758
    %760 = vrot.lane.b32.xlu0 %v753, 126
    %v761 = vpop.permute.xlu0 %760
    %v762 = vsel %vm279, %v755, %v757
    %v763 = vsel %vm279, %v757, %v759
    %v764 = vsel %vm279, %v759, %v761
    %768 = vst [vmem:[#allocation2 + $0x18] sm:$0xf] %v762
    %769 = vst [vmem:[#allocation2 + $0x20] sm:$0xf] %v763
    %770 = vst [vmem:[#allocation2 + $0x28] sm:$0xf] %v764
    %v771 = vld [vmem:[%s691] sm:$0xff]
    %v772 = vld [vmem:[%s691 + $0x8] sm:$0xff]
    %v773 = vmul.f32 %v771, %v306
    %v774 = vmul.f32 %v772, %v308
    %s777 = scalar_lea.vmem [#allocation1], 1
    %778 = vst [vmem:[%s777] ss:$2 sm:$0xff] %v773
    %s779 = scalar_lea.vmem [#allocation1], 17
    %780 = vst [vmem:[%s779] ss:$2 sm:$0xff] %v774
    %v781 = vld.sshfl [vmem:[#allocation1] sm:$0xff pattern:$0x75316420]
    %v782 = vld.sshfl [vmem:[#allocation1 + $0x8] sm:$0xff pattern:$0x75316420]
    %v783 = vld.sshfl [vmem:[#allocation1 + $0x10] sm:$0xff pattern:$0x75316420]
    %v784 = vld.sshfl [vmem:[#allocation1 + $0x18] sm:$0xff pattern:$0x75316420]
    %785 = vrot.lane.b32.xlu0 %v781, 110
    %v786 = vpop.permute.xlu0 %785
    %787 = vrot.lane.b32.xlu0 %v782, 110
    %v788 = vpop.permute.xlu0 %787
    %789 = vrot.lane.b32.xlu0 %v783, 110
    %v790 = vpop.permute.xlu0 %789
    %791 = vrot.lane.b32.xlu0 %v784, 110
    %v792 = vpop.permute.xlu0 %791
    %v793 = vsel %vm331, %v786, %v788
    %v794 = vsel %vm331, %v788, %v790
    %v795 = vsel %vm331, %v790, %v792
    %799 = vst [vmem:[#allocation2 + $0x18] sm:$0xf0] %v793
    %800 = vst [vmem:[#allocation2 + $0x20] sm:$0xf0] %v794
    %801 = vst [vmem:[#allocation2 + $0x28] sm:$0xf0] %v795
    %v802 = vld [vmem:[%s691] sm:$0xff]
    %v803 = vld [vmem:[%s691 + $0x8] sm:$0xff]
    %v804 = vmul.f32 %v802, %v358
    %v805 = vmul.f32 %v803, %v360
    %808 = vst [vmem:[#allocation1] ss:$2 sm:$0xff] %v804
    %s809 = scalar_lea.vmem [#allocation1], 16
    %810 = vst [vmem:[%s809] ss:$2 sm:$0xff] %v805
    %v811 = vld.sshfl [vmem:[#allocation1] sm:$0xff pattern:$0x75316420]
    %v812 = vld.sshfl [vmem:[#allocation1 + $0x8] sm:$0xff pattern:$0x75316420]
    %v813 = vld.sshfl [vmem:[#allocation1 + $0x10] sm:$0xff pattern:$0x75316420]
    %v814 = vld.sshfl [vmem:[#allocation1 + $0x18] sm:$0xff pattern:$0x75316420]
    %815 = vrot.lane.b32.xlu0 %v811, 109
    %v816 = vpop.permute.xlu0 %815
    %817 = vrot.lane.b32.xlu0 %v812, 109
    %v818 = vpop.permute.xlu0 %817
    %819 = vrot.lane.b32.xlu0 %v813, 109
    %v820 = vpop.permute.xlu0 %819
    %821 = vrot.lane.b32.xlu0 %v814, 109
    %v822 = vpop.permute.xlu0 %821
    %v823 = vsel %vm382, %v816, %v818
    %v824 = vsel %vm382, %v818, %v820
    %v825 = vsel %vm382, %v820, %v822
    %829 = vst [vmem:[#allocation2 + $0x30] sm:$0xf] %v823
    %830 = vst [vmem:[#allocation2 + $0x38] sm:$0xf] %v824
    %831 = vst [vmem:[#allocation2 + $0x40] sm:$0xf] %v825
    %v832 = vld [vmem:[%s691] sm:$0xff]
    %v833 = vld [vmem:[%s691 + $0x8] sm:$0xff]
    %v834 = vmul.f32 %v832, %v409
    %v835 = vmul.f32 %v833, %v411
    %s838 = scalar_lea.vmem [#allocation1], 1
    %839 = vst [vmem:[%s838] ss:$2 sm:$0xff] %v834
    %s840 = scalar_lea.vmem [#allocation1], 17
    %841 = vst [vmem:[%s840] ss:$2 sm:$0xff] %v835
    %v842 = vld.sshfl [vmem:[#allocation1] sm:$0xff pattern:$0x75316420]
    %v843 = vld.sshfl [vmem:[#allocation1 + $0x8] sm:$0xff pattern:$0x75316420]
    %v844 = vld.sshfl [vmem:[#allocation1 + $0x10] sm:$0xff pattern:$0x75316420]
    %v845 = vld.sshfl [vmem:[#allocation1 + $0x18] sm:$0xff pattern:$0x75316420]
    %846 = vrot.lane.b32.xlu0 %v842, 108
    %v847 = vpop.permute.xlu0 %846
    %848 = vrot.lane.b32.xlu0 %v843, 108
    %v849 = vpop.permute.xlu0 %848
    %850 = vrot.lane.b32.xlu0 %v844, 108
    %v851 = vpop.permute.xlu0 %850
    %852 = vrot.lane.b32.xlu0 %v845, 108
    %v853 = vpop.permute.xlu0 %852
    %v854 = vsel %vm434, %v847, %v849
    %v855 = vsel %vm434, %v849, %v851
    %v856 = vsel %vm434, %v851, %v853
    %860 = vst [vmem:[#allocation2 + $0x30] sm:$0xf0] %v854
    %861 = vst [vmem:[#allocation2 + $0x38] sm:$0xf0] %v855
    %862 = vst [vmem:[#allocation2 + $0x40] sm:$0xf0] %v856
    %v863 = vld [vmem:[%s691] sm:$0xff]
    %v864 = vld [vmem:[%s691 + $0x8] sm:$0xff]
    %v865 = vmul.f32 %v863, %v461
    %v866 = vmul.f32 %v864, %v463
    %869 = vst [vmem:[#allocation1] ss:$2 sm:$0xff] %v865
    %s870 = scalar_lea.vmem [#allocation1], 16
    %871 = vst [vmem:[%s870] ss:$2 sm:$0xff] %v866
    %v872 = vld.sshfl [vmem:[#allocation1] sm:$0xff pattern:$0x75316420]
    %v873 = vld.sshfl [vmem:[#allocation1 + $0x8] sm:$0xff pattern:$0x75316420]
    %v874 = vld.sshfl [vmem:[#allocation1 + $0x10] sm:$0xff pattern:$0x75316420]
    %v875 = vld.sshfl [vmem:[#allocation1 + $0x18] sm:$0xff pattern:$0x75316420]
    %876 = vrot.lane.b32.xlu0 %v872, 92
    %v877 = vpop.permute.xlu0 %876
    %878 = vrot.lane.b32.xlu0 %v873, 92
    %v879 = vpop.permute.xlu0 %878
    %880 = vrot.lane.b32.xlu0 %v874, 92
    %v881 = vpop.permute.xlu0 %880
    %882 = vrot.lane.b32.xlu0 %v875, 92
    %v883 = vpop.permute.xlu0 %882
    %v884 = vsel %vm485, %v877, %v879
    %v885 = vsel %vm485, %v879, %v881
    %v886 = vsel %vm485, %v881, %v883
    %890 = vst [vmem:[#allocation2 + $0x48] sm:$0xf] %v884
    %891 = vst [vmem:[#allocation2 + $0x50] sm:$0xf] %v885
    %892 = vst [vmem:[#allocation2 + $0x58] sm:$0xf] %v886
    %v893 = vld [vmem:[%s691] sm:$0xff]
    %v894 = vld [vmem:[%s691 + $0x8] sm:$0xff]
    %v895 = vmul.f32 %v893, %v512
    %v896 = vmul.f32 %v894, %v514
    %s899 = scalar_lea.vmem [#allocation1], 1
    %900 = vst [vmem:[%s899] ss:$2 sm:$0xff] %v895
    %s901 = scalar_lea.vmem [#allocation1], 17
    %902 = vst [vmem:[%s901] ss:$2 sm:$0xff] %v896
    %v903 = vld.sshfl [vmem:[#allocation1] sm:$0xff pattern:$0x75316420]
    %v904 = vld.sshfl [vmem:[#allocation1 + $0x8] sm:$0xff pattern:$0x75316420]
    %v905 = vld.sshfl [vmem:[#allocation1 + $0x10] sm:$0xff pattern:$0x75316420]
    %v906 = vld.sshfl [vmem:[#allocation1 + $0x18] sm:$0xff pattern:$0x75316420]
    %907 = vrot.lane.b32.xlu0 %v903, 91
    %v908 = vpop.permute.xlu0 %907
    %909 = vrot.lane.b32.xlu0 %v904, 91
    %v910 = vpop.permute.xlu0 %909
    %911 = vrot.lane.b32.xlu0 %v905, 91
    %v912 = vpop.permute.xlu0 %911
    %913 = vrot.lane.b32.xlu0 %v906, 91
    %v914 = vpop.permute.xlu0 %913
    %v915 = vsel %vm537, %v908, %v910
    %v916 = vsel %vm537, %v910, %v912
    %v917 = vsel %vm537, %v912, %v914
    %921 = vst [vmem:[#allocation2 + $0x48] sm:$0xf0] %v915
    %922 = vst [vmem:[#allocation2 + $0x50] sm:$0xf0] %v916
    %923 = vst [vmem:[#allocation2 + $0x58] sm:$0xf0] %v917
    %v924 = vld [vmem:[%s691] sm:$0xff]
    %v925 = vld [vmem:[%s691 + $0x8] sm:$0xff]
    %v926 = vmul.f32 %v924, %v564
    %v927 = vmul.f32 %v925, %v566
    %930 = vst [vmem:[#allocation1] ss:$2 sm:$0xff] %v926
    %s931 = scalar_lea.vmem [#allocation1], 16
    %932 = vst [vmem:[%s931] ss:$2 sm:$0xff] %v927
    %v933 = vld.sshfl [vmem:[#allocation1] sm:$0xff pattern:$0x75316420]
    %v934 = vld.sshfl [vmem:[#allocation1 + $0x8] sm:$0xff pattern:$0x75316420]
    %v935 = vld.sshfl [vmem:[#allocation1 + $0x10] sm:$0xff pattern:$0x75316420]
    %v936 = vld.sshfl [vmem:[#allocation1 + $0x18] sm:$0xff pattern:$0x75316420]
    %937 = vrot.lane.b32.xlu0 %v933, 90
    %v938 = vpop.permute.xlu0 %937
    %939 = vrot.lane.b32.xlu0 %v934, 90
    %v940 = vpop.permute.xlu0 %939
    %941 = vrot.lane.b32.xlu0 %v935, 90
    %v942 = vpop.permute.xlu0 %941
    %943 = vrot.lane.b32.xlu0 %v936, 90
    %v944 = vpop.permute.xlu0 %943
    %v945 = vsel %vm588, %v938, %v940
    %v946 = vsel %vm588, %v940, %v942
    %v947 = vsel %vm588, %v942, %v944
    %951 = vst [vmem:[#allocation2 + $0x60] sm:$0xf] %v945
    %952 = vst [vmem:[#allocation2 + $0x68] sm:$0xf] %v946
    %953 = vst [vmem:[#allocation2 + $0x70] sm:$0xf] %v947
    %v954 = vld [vmem:[#allocation2] sm:$0xff]
    %v955 = vld [vmem:[#allocation2 + $0x8] sm:$0xff]
    %v956 = vld [vmem:[#allocation2 + $0x10] sm:$0xff]
    %v957 = vld [vmem:[#allocation2 + $0x18] sm:$0xff]
    %v958 = vld [vmem:[#allocation2 + $0x20] sm:$0xff]
    %v959 = vld [vmem:[#allocation2 + $0x28] sm:$0xff]
    %v960 = vld [vmem:[#allocation2 + $0x30] sm:$0xff]
    %v961 = vld [vmem:[#allocation2 + $0x38] sm:$0xff]
    %v962 = vld [vmem:[#allocation2 + $0x40] sm:$0xff]
    %v963 = vld [vmem:[#allocation2 + $0x48] sm:$0xff]
    %v964 = vld [vmem:[#allocation2 + $0x50] sm:$0xff]
    %v965 = vld [vmem:[#allocation2 + $0x58] sm:$0xff]
    %v966 = vld [vmem:[#allocation2 + $0x60] sm:$0xf]
    %v967 = vld [vmem:[#allocation2 + $0x68] sm:$0xf]
    %v968 = vld [vmem:[#allocation2 + $0x70] sm:$0xf]
    %v970 = vsel %vm167, %v966, 0
    %v973 = vsel %vm167, %v967, 0
    %v976 = vsel %vm167, %v968, 0
    %978 = vmatpush.msra.mxu0 0.0
    %979 = vmatpush.msra.mxu0 0.0
    %980 = vmatpush.msra.mxu0 0.0
    %981 = vmatpush.msra.mxu0 0.0
    %982 = vmatpush.msra.mxu0 0.0
    %983 = vmatpush.msra.mxu0 0.0
    %984 = vmatpush.msra.mxu0 0.0
    %985 = vmatpush.msra.mxu0 0.0
    %986 = vmatpush.msra.mxu0 0.0
    %987 = vmatpush.msra.mxu0 0.0
    %988 = vmatpush.msra.mxu0 0.0
    %989 = vmatpush.msra.mxu0 %v970
    %990 = vmatpush.msra.mxu0 %v963
    %991 = vmatpush.msra.mxu0 %v960
    %992 = vmatpush.msra.mxu0 %v957
    %993 = vmatpush.msra.mxu0 %v954
    %994 = vmatmul.f32.gmra.mxu0 %v614
    %v995 = vpop.f32.mrf.mxu0
    %v996 = vadd.f32 0.0, %v995
    %997 = vdwg.mxu0
    %998 = vmatpush.msra.mxu0 0.0
    %999 = vmatpush.msra.mxu0 0.0
    %1000 = vmatpush.msra.mxu0 0.0
    %1001 = vmatpush.msra.mxu0 0.0
    %1002 = vmatpush.msra.mxu0 0.0
    %1003 = vmatpush.msra.mxu0 0.0
    %1004 = vmatpush.msra.mxu0 0.0
    %1005 = vmatpush.msra.mxu0 0.0
    %1006 = vmatpush.msra.mxu0 0.0
    %1007 = vmatpush.msra.mxu0 0.0
    %1008 = vmatpush.msra.mxu0 0.0
    %1009 = vmatpush.msra.mxu0 %v973
    %1010 = vmatpush.msra.mxu0 %v964
    %1011 = vmatpush.msra.mxu0 %v961
    %1012 = vmatpush.msra.mxu0 %v958
    %1013 = vmatpush.msra.mxu0 %v955
    %1014 = vmatmul.f32.gmra.mxu0 %v614
    %v1015 = vpop.f32.mrf.mxu0
    %v1016 = vadd.f32 0.0, %v1015
    %1017 = vdwg.mxu0
    %1018 = vmatpush.msra.mxu0 0.0
    %1019 = vmatpush.msra.mxu0 0.0
    %1020 = vmatpush.msra.mxu0 0.0
    %1021 = vmatpush.msra.mxu0 0.0
    %1022 = vmatpush.msra.mxu0 0.0
    %1023 = vmatpush.msra.mxu0 0.0
    %1024 = vmatpush.msra.mxu0 0.0
    %1025 = vmatpush.msra.mxu0 0.0
    %1026 = vmatpush.msra.mxu0 0.0
    %1027 = vmatpush.msra.mxu0 0.0
    %1028 = vmatpush.msra.mxu0 0.0
    %1029 = vmatpush.msra.mxu0 %v976
    %1030 = vmatpush.msra.mxu0 %v965
    %1031 = vmatpush.msra.mxu0 %v962
    %1032 = vmatpush.msra.mxu0 %v959
    %1033 = vmatpush.msra.mxu0 %v956
    %1034 = vmatmul.f32.gmra.mxu0 %v614
    %v1035 = vpop.f32.mrf.mxu0
    %v1036 = vadd.f32 0.0, %v1035
    %1037 = vdwg.mxu0
    %v1038 = vadd.f32 %v116, %v996
    %v1039 = vadd.f32 %v136, %v1016
    %v1040 = vadd.f32 %v156, %v1036
    %s1041 = scalar_lea.vmem [#allocation11], 24
    %1042 = vst [vmem:[%s1041] sm:$0xff] %v1038
    %1043 = vst [vmem:[%s1041 + $0x8] sm:$0xff] %v1039
    %1044 = vst [vmem:[%s1041 + $0x10] sm:$0xff] %v1040
    // Predicated region
    $region34: #{tpu_custom_call.1} parent=1 // pred_check
      _
    $region35: #{tpu_custom_call.1} parent=1 // pred_check_branch
      %1046 = sbr.rel (0) target = $region37
    $region36: #{tpu_custom_call.1} parent=1 // pred_region
      %1048 = vsyncadd [#allocation5], 0
      %s1049 = sshll.u32 [#allocation11], 4
      %s1050 = int_to_ptr.vmem [resolvable:$true] %s1049
      %s1051 = sshll.u32 %s4, 4
      %s1052 = int_to_ptr.hbm [resolvable:$true] %s1051
      %1057 = dma.vmem_to_hbm [thread:$0]  %s1050, 768, %s1052, [#allocation5], 384, 384, 24
    $region37: #{tpu_custom_call.1} parent=1 // pred_fallthru
      _
    // Predicated region
    $region38: #{tpu_custom_call.1} parent=1 // pred_check
      _
    $region39: #{tpu_custom_call.1} parent=1 // pred_check_branch
      %1059 = sbr.rel (0) target = $region41
    $region40: #{tpu_custom_call.1} parent=1 // pred_region
      %1061 = dma.done [#allocation5], 768
    $region41: #{tpu_custom_call.1} parent=1 // pred_fallthru
      _
    %1062 = vsyncpa [#allocation4], 1
    %1063 = vsyncpa [#allocation7], 1
    %1064 = vsyncpa [#allocation10], 1
    %1065 = vsyncpa [#allocation5], 1

// kernel: tpu_custom_call.1
$region0: #{tpu_custom_call.1}
  #allocation0 [shape = 'u32[]', space=smem, size = 0x4, offset = 0x4, fixed_abs, tag = 'smem constant byte address 0x4 - core index']
  #allocation1 [shape = 'u32[72,128]{1,0:T(1,128)}', space=vmem, size = 0x9000, scoped, tag = 'internal scratch']
  #allocation2 [shape = 'f32[36,384]{1,0:T(8,128)}', space=vmem, size = 0xf000, scoped, tag = 'scratch operand']
  %s0 = inlined_call_operand.hbm [shape: f32[2,4,432], index: 0, kind: input, shape index: {}]
  %s1 = inlined_call_operand.hbm [shape: f32[10,384], index: 1, kind: input, shape index: {}]
  %s2 = inlined_call_operand.hbm [shape: f32[8,10], index: 2, kind: input, shape index: {}]
  %s3 = inlined_call_operand.hbm [shape: f32[8,36], index: 3, kind: input, shape index: {}]
  %s4 = inlined_call_operand.hbm [shape: f32[2,8,384], index: 4, kind: output, shape index: {}]
  %s5 = sld [smem:[#allocation0]]
  $region42: #{tpu_custom_call.1} parent=0
    _
  %s7 = ssub.s32 1, %s5
  %s8 = scalar_select 0, %s7, %s5
  $region1: #{tpu_custom_call.1} parent=0
    #allocation3 [shape = 'u8[16384]{0}', space=vmem, size = 0x4000, scoped, tag = 'input window, operand 0, single buffered']
    #allocation4 [shape = 's32[1]{0}', space=sflag, size = 0x4, scoped, tag = 'scoped memory for tpu_custom_call.1']
    #allocation5 [shape = 's32[1]{0}', space=sflag, size = 0x4, scoped, tag = 'scoped memory for tpu_custom_call.1']
    #allocation6 [shape = 'u8[24576]{0}', space=vmem, size = 0x6000, scoped, tag = 'input window, operand 1, single buffered']
    #allocation7 [shape = 's32[1]{0}', space=sflag, size = 0x4, scoped, tag = 'scoped memory for tpu_custom_call.1']
    #allocation8 [shape = 'u8[4096]{0}', space=vmem, size = 0x1000, scoped, tag = 'input window, operand 2, single buffered']
    #allocation9 [shape = 'u8[4096]{0}', space=vmem, size = 0x1000, scoped, tag = 'input window, operand 3, single buffered']
    #allocation10 [shape = 's32[1]{0}', space=sflag, size = 0x4, scoped, tag = 'scoped memory for tpu_custom_call.1']
    #allocation11 [shape = 'u8[24576]{0}', space=vmem, size = 0x6000, scoped, tag = 'output window, operand 0, single buffered']
    %9 = vsyncpa [#allocation4], 0
    %10 = vsyncpa [#allocation7], 0
    %11 = vsyncpa [#allocation10], 0
    %12 = vsyncpa [#allocation5], 0
    // Predicated region
    $region2: #{tpu_custom_call.1} parent=1 // pred_check
      _
    $region3: #{tpu_custom_call.1} parent=1 // pred_check_branch
      %14 = sbr.rel (0) target = $region5
    $region4: #{tpu_custom_call.1} parent=1 // pred_region
      %16 = vsyncadd [#allocation4], 0
      %s17 = sshll.u32 %s0, 4
      %s18 = int_to_ptr.hbm [resolvable:$true] %s17
      %s19 = sshll.u32 [#allocation3], 4
      %s20 = int_to_ptr.vmem [resolvable:$true] %s19
      %25 = dma.hbm_to_vmem [thread:$0]  %s18, 512, %s20, [#allocation4], 256, 256, 16
    $region5: #{tpu_custom_call.1} parent=1 // pred_fallthru
      _
    // Predicated region
    $region6: #{tpu_custom_call.1} parent=1 // pred_check
      _
    $region7: #{tpu_custom_call.1} parent=1 // pred_check_branch
      %27 = sbr.rel (0) target = $region9
    $region8: #{tpu_custom_call.1} parent=1 // pred_region
      %29 = vsyncadd [#allocation7], 0
      %s30 = sshll.u32 %s1, 4
      %s31 = int_to_ptr.hbm [resolvable:$true] %s30
      %s32 = sshll.u32 [#allocation6], 4
      %s33 = int_to_ptr.vmem [resolvable:$true] %s32
      %38 = dma.hbm_to_vmem [thread:$0]  %s31, 768, %s33, [#allocation7], 384, 384, 24
    $region9: #{tpu_custom_call.1} parent=1 // pred_fallthru
      _
    // Predicated region
    $region10: #{tpu_custom_call.1} parent=1 // pred_check
      _
    $region11: #{tpu_custom_call.1} parent=1 // pred_check_branch
      %40 = sbr.rel (0) target = $region13
    $region12: #{tpu_custom_call.1} parent=1 // pred_region
      %42 = vsyncadd [#allocation7], 0
      %s44 = sshll.u32 %s2, 4
      %s45 = int_to_ptr.hbm [resolvable:$true] %s44
      %s46 = sshll.u32 [#allocation8], 4
      %s47 = int_to_ptr.vmem [resolvable:$true] %s46
      %49 = dma.hbm_to_vmem [thread:$0]  %s45, 128, %s47, [#allocation7]
    $region13: #{tpu_custom_call.1} parent=1 // pred_fallthru
      _
    // Predicated region
    $region14: #{tpu_custom_call.1} parent=1 // pred_check
      _
    $region15: #{tpu_custom_call.1} parent=1 // pred_check_branch
      %51 = sbr.rel (0) target = $region17
    $region16: #{tpu_custom_call.1} parent=1 // pred_region
      %53 = vsyncadd [#allocation10], 0
      %s55 = sshll.u32 %s3, 4
      %s56 = int_to_ptr.hbm [resolvable:$true] %s55
      %s57 = sshll.u32 [#allocation9], 4
      %s58 = int_to_ptr.vmem [resolvable:$true] %s57
      %60 = dma.hbm_to_vmem [thread:$0]  %s56, 128, %s58, [#allocation10]
    $region17: #{tpu_custom_call.1} parent=1 // pred_fallthru
      _
    // Predicated region
    $region18: #{tpu_custom_call.1} parent=1 // pred_check
      _
    $region19: #{tpu_custom_call.1} parent=1 // pred_check_branch
      %62 = sbr.rel (0) target = $region21
    $region20: #{tpu_custom_call.1} parent=1 // pred_region
      %64 = dma.done [#allocation4], 512
    $region21: #{tpu_custom_call.1} parent=1 // pred_fallthru
      _
    // Predicated region
    $region22: #{tpu_custom_call.1} parent=1 // pred_check
      _
    $region23: #{tpu_custom_call.1} parent=1 // pred_check_branch
      %66 = sbr.rel (0) target = $region25
    $region24: #{tpu_custom_call.1} parent=1 // pred_region
      %68 = dma.done [#allocation7], 768
    $region25: #{tpu_custom_call.1} parent=1 // pred_fallthru
      _
    // Predicated region
    $region26: #{tpu_custom_call.1} parent=1 // pred_check
      _
    $region27: #{tpu_custom_call.1} parent=1 // pred_check_branch
      %70 = sbr.rel (0) target = $region29
    $region28: #{tpu_custom_call.1} parent=1 // pred_region
      %72 = dma.done [#allocation7], 128
    $region29: #{tpu_custom_call.1} parent=1 // pred_fallthru
      _
    // Predicated region
    $region30: #{tpu_custom_call.1} parent=1 // pred_check
      _
    $region31: #{tpu_custom_call.1} parent=1 // pred_check_branch
      %74 = sbr.rel (0) target = $region33
    $region32: #{tpu_custom_call.1} parent=1 // pred_region
      %76 = dma.done [#allocation10], 128
    $region33: #{tpu_custom_call.1} parent=1 // pred_fallthru
      _
    %v77 = vld [vmem:[#allocation6] sm:$0xff]
    %v78 = vld [vmem:[#allocation6 + $0x8] sm:$0xff]
    %v79 = vld [vmem:[#allocation6 + $0x10] sm:$0xff]
    %v80 = vld [vmem:[#allocation6 + $0x18] sm:$0x3]
    %v81 = vld [vmem:[#allocation6 + $0x20] sm:$0x3]
    %v82 = vld [vmem:[#allocation6 + $0x28] sm:$0x3]
    %v83 = vld [vmem:[#allocation8] sm:$0xff]
    %vm84 = vcmask 80896
    %v86 = vsel %vm84, %v83, 0
    %vm88 = vcmask 1041408
    %v90 = vsel %vm88, %v80, 0
    %v93 = vsel %vm88, %v81, 0
    %v96 = vsel %vm88, %v82, 0
    %98 = vmatpush.msra.mxu0 0.0
    %99 = vmatpush.msra.mxu0 0.0
    %100 = vmatpush.msra.mxu0 0.0
    %101 = vmatpush.msra.mxu0 0.0
    %102 = vmatpush.msra.mxu0 0.0
    %103 = vmatpush.msra.mxu0 0.0
    %104 = vmatpush.msra.mxu0 0.0
    %105 = vmatpush.msra.mxu0 0.0
    %106 = vmatpush.msra.mxu0 0.0
    %107 = vmatpush.msra.mxu0 0.0
    %108 = vmatpush.msra.mxu0 0.0
    %109 = vmatpush.msra.mxu0 0.0
    %110 = vmatpush.msra.mxu0 0.0
    %111 = vmatpush.msra.mxu0 0.0
    %112 = vmatpush.msra.mxu0 %v90
    %113 = vmatpush.msra.mxu0 %v77
    %114 = vmatmul.f32.gmra.mxu0 %v86
    %v115 = vpop.f32.mrf.mxu0
    %v116 = vadd.f32 0.0, %v115
    %117 = vdwg.mxu0
    %118 = vmatpush.msra.mxu0 0.0
    %119 = vmatpush.msra.mxu0 0.0
    %120 = vmatpush.msra.mxu0 0.0
    %121 = vmatpush.msra.mxu0 0.0
    %122 = vmatpush.msra.mxu0 0.0
    %123 = vmatpush.msra.mxu0 0.0
    %124 = vmatpush.msra.mxu0 0.0
    %125 = vmatpush.msra.mxu0 0.0
    %126 = vmatpush.msra.mxu0 0.0
    %127 = vmatpush.msra.mxu0 0.0
    %128 = vmatpush.msra.mxu0 0.0
    %129 = vmatpush.msra.mxu0 0.0
    %130 = vmatpush.msra.mxu0 0.0
    %131 = vmatpush.msra.mxu0 0.0
    %132 = vmatpush.msra.mxu0 %v93
    %133 = vmatpush.msra.mxu0 %v78
    %134 = vmatmul.f32.gmra.mxu0 %v86
    %v135 = vpop.f32.mrf.mxu0
    %v136 = vadd.f32 0.0, %v135
    %137 = vdwg.mxu0
    %138 = vmatpush.msra.mxu0 0.0
    %139 = vmatpush.msra.mxu0 0.0
    %140 = vmatpush.msra.mxu0 0.0
    %141 = vmatpush.msra.mxu0 0.0
    %142 = vmatpush.msra.mxu0 0.0
    %143 = vmatpush.msra.mxu0 0.0
    %144 = vmatpush.msra.mxu0 0.0
    %145 = vmatpush.msra.mxu0 0.0
    %146 = vmatpush.msra.mxu0 0.0
    %147 = vmatpush.msra.mxu0 0.0
    %148 = vmatpush.msra.mxu0 0.0
    %149 = vmatpush.msra.mxu0 0.0
    %150 = vmatpush.msra.mxu0 0.0
    %151 = vmatpush.msra.mxu0 0.0
    %152 = vmatpush.msra.mxu0 %v96
    %153 = vmatpush.msra.mxu0 %v79
    %154 = vmatmul.f32.gmra.mxu0 %v86
    %v155 = vpop.f32.mrf.mxu0
    %v156 = vadd.f32 0.0, %v155
    %157 = vdwg.mxu0
    %v158 = vld [vmem:[#allocation9] sm:$0xff]
    %v159 = vld [vmem:[#allocation3] sm:$0xff]
    %v160 = vld [vmem:[#allocation3 + $0x8] sm:$0xf]
    %v161 = vperm.slane %v77, 0
    %v162 = vperm.slane %v78, 0
    %v163 = vperm.slane %v79, 0
    %v166 = vrot.slane %v162, 4
    %vm167 = vcmask 1043456
    %v168 = vsel %vm167, %v161, %v166
    %v170 = vmul.f32 %v159, %v168
    %v171 = vmul.f32 %v160, %v163
    %174 = vst [vmem:[#allocation1] ss:$2 sm:$0xff] %v170
    %s175 = scalar_lea.vmem [#allocation1], 16
    %176 = vst [vmem:[%s175] ss:$2 sm:$0xff] %v171
    %v177 = vld.sshfl [vmem:[#allocation1] sm:$0xff pattern:$0x75316420]
    %v178 = vld.sshfl [vmem:[#allocation1 + $0x8] sm:$0xff pattern:$0x75316420]
    %v179 = vld.sshfl [vmem:[#allocation1 + $0x10] sm:$0xff pattern:$0x75316420]
    %183 = vst [vmem:[#allocation2] sm:$0xf] %v177
    %184 = vst [vmem:[#allocation2 + $0x8] sm:$0xf] %v178
    %185 = vst [vmem:[#allocation2 + $0x10] sm:$0xf] %v179
    %v186 = vld [vmem:[#allocation3] sm:$0xff]
    %v187 = vld [vmem:[#allocation3 + $0x8] sm:$0xff]
    %v188 = vperm.slane %v77, 1
    %v189 = vperm.slane %v78, 1
    %v190 = vperm.slane %v79, 1
    %v194 = vrot.slane %v189, 4
    %v195 = vsel %vm167, %v188, %v194
    %196 = vrot.lane.b32.xlu0 %v195, 1
    %v197 = vpop.permute.xlu0 %196
    %198 = vrot.lane.b32.xlu0 %v190, 1
    %v199 = vpop.permute.xlu0 %198
    %v200 = vrot.slane %v197, 4
    %v201 = vrot.slane %v199, 4
    %vm202 = vcmask 7168
    %v203 = vsel %vm202, %v200, %v197
    %v204 = vsel %vm167, %v200, %v201
    %v205 = vsel %vm202, %v204, %v199
    %v208 = vmul.f32 %v186, %v203
    %v209 = vmul.f32 %v187, %v205
    %s212 = scalar_lea.vmem [#allocation1], 1
    %213 = vst [vmem:[%s212] ss:$2 sm:$0xff] %v208
    %s214 = scalar_lea.vmem [#allocation1], 17
    %215 = vst [vmem:[%s214] ss:$2 sm:$0xff] %v209
    %v216 = vld.sshfl [vmem:[#allocation1] sm:$0xff pattern:$0x75316420]
    %v217 = vld.sshfl [vmem:[#allocation1 + $0x8] sm:$0xff pattern:$0x75316420]
    %v218 = vld.sshfl [vmem:[#allocation1 + $0x10] sm:$0xff pattern:$0x75316420]
    %v219 = vld.sshfl [vmem:[#allocation1 + $0x18] sm:$0xff pattern:$0x75316420]
    %220 = vrot.lane.b32.xlu0 %v216, 127
    %v221 = vpop.permute.xlu0 %220
    %222 = vrot.lane.b32.xlu0 %v217, 127
    %v223 = vpop.permute.xlu0 %222
    %224 = vrot.lane.b32.xlu0 %v218, 127
    %v225 = vpop.permute.xlu0 %224
    %226 = vrot.lane.b32.xlu0 %v219, 127
    %v227 = vpop.permute.xlu0 %226
    %vm228 = vcmask 1039360
    %v229 = vsel %vm228, %v221, %v223
    %v230 = vsel %vm228, %v223, %v225
    %v231 = vsel %vm228, %v225, %v227
    %235 = vst [vmem:[#allocation2] sm:$0xf0] %v229
    %236 = vst [vmem:[#allocation2 + $0x8] sm:$0xf0] %v230
    %237 = vst [vmem:[#allocation2 + $0x10] sm:$0xf0] %v231
    %v238 = vld [vmem:[#allocation3] sm:$0xff]
    %v239 = vld [vmem:[#allocation3 + $0x8] sm:$0xff]
    %v240 = vperm.slane %v77, 2
    %v241 = vperm.slane %v78, 2
    %v242 = vperm.slane %v79, 2
    %v246 = vrot.slane %v241, 4
    %v247 = vsel %vm167, %v240, %v246
    %248 = vrot.lane.b32.xlu0 %v247, 2
    %v249 = vpop.permute.xlu0 %248
    %250 = vrot.lane.b32.xlu0 %v242, 2
    %v251 = vpop.permute.xlu0 %250
    %v252 = vrot.slane %v249, 4
    %v253 = vrot.slane %v251, 4
    %vm254 = vcmask 15360
    %v255 = vsel %vm254, %v252, %v249
    %v256 = vsel %vm167, %v252, %v253
    %v257 = vsel %vm254, %v256, %v251
    %v260 = vmul.f32 %v238, %v255
    %v261 = vmul.f32 %v239, %v257
    %264 = vst [vmem:[#allocation1] ss:$2 sm:$0xff] %v260
    %s265 = scalar_lea.vmem [#allocation1], 16
    %266 = vst [vmem:[%s265] ss:$2 sm:$0xff] %v261
    %v267 = vld.sshfl [vmem:[#allocation1] sm:$0xff pattern:$0x75316420]
    %v268 = vld.sshfl [vmem:[#allocation1 + $0x8] sm:$0xff pattern:$0x75316420]
    %v269 = vld.sshfl [vmem:[#allocation1 + $0x10] sm:$0xff pattern:$0x75316420]
    %v270 = vld.sshfl [vmem:[#allocation1 + $0x18] sm:$0xff pattern:$0x75316420]
    %271 = vrot.lane.b32.xlu0 %v267, 126
    %v272 = vpop.permute.xlu0 %271
    %273 = vrot.lane.b32.xlu0 %v268, 126
    %v274 = vpop.permute.xlu0 %273
    %275 = vrot.lane.b32.xlu0 %v269, 126
    %v276 = vpop.permute.xlu0 %275
    %277 = vrot.lane.b32.xlu0 %v270, 126
    %v278 = vpop.permute.xlu0 %277
    %vm279 = vcmask 1031168
    %v280 = vsel %vm279, %v272, %v274
    %v281 = vsel %vm279, %v274, %v276
    %v282 = vsel %vm279, %v276, %v278
    %286 = vst [vmem:[#allocation2 + $0x18] sm:$0xf] %v280
    %287 = vst [vmem:[#allocation2 + $0x20] sm:$0xf] %v281
    %288 = vst [vmem:[#allocation2 + $0x28] sm:$0xf] %v282
    %v289 = vld [vmem:[#allocation3] sm:$0xff]
    %v290 = vld [vmem:[#allocation3 + $0x8] sm:$0xff]
    %v291 = vperm.slane %v77, 3
    %v292 = vperm.slane %v78, 3
    %v293 = vperm.slane %v79, 3
    %v297 = vrot.slane %v292, 4
    %v298 = vsel %vm167, %v291, %v297
    %299 = vrot.lane.b32.xlu0 %v298, 18
    %v300 = vpop.permute.xlu0 %299
    %301 = vrot.lane.b32.xlu0 %v293, 18
    %v302 = vpop.permute.xlu0 %301
    %v303 = vrot.slane %v300, 4
    %v304 = vrot.slane %v302, 4
    %vm305 = vcmask 146432
    %v306 = vsel %vm305, %v303, %v300
    %v307 = vsel %vm167, %v303, %v304
    %v308 = vsel %vm305, %v307, %v302
    %v311 = vmul.f32 %v289, %v306
    %v312 = vmul.f32 %v290, %v308
    %s315 = scalar_lea.vmem [#allocation1], 1
    %316 = vst [vmem:[%s315] ss:$2 sm:$0xff] %v311
    %s317 = scalar_lea.vmem [#allocation1], 17
    %318 = vst [vmem:[%s317] ss:$2 sm:$0xff] %v312
    %v319 = vld.sshfl [vmem:[#allocation1] sm:$0xff pattern:$0x75316420]
    %v320 = vld.sshfl [vmem:[#allocation1 + $0x8] sm:$0xff pattern:$0x75316420]
    %v321 = vld.sshfl [vmem:[#allocation1 + $0x10] sm:$0xff pattern:$0x75316420]
    %v322 = vld.sshfl [vmem:[#allocation1 + $0x18] sm:$0xff pattern:$0x75316420]
    %323 = vrot.lane.b32.xlu0 %v319, 110
    %v324 = vpop.permute.xlu0 %323
    %325 = vrot.lane.b32.xlu0 %v320, 110
    %v326 = vpop.permute.xlu0 %325
    %327 = vrot.lane.b32.xlu0 %v321, 110
    %v328 = vpop.permute.xlu0 %327
    %329 = vrot.lane.b32.xlu0 %v322, 110
    %v330 = vpop.permute.xlu0 %329
    %vm331 = vcmask 900096
    %v332 = vsel %vm331, %v324, %v326
    %v333 = vsel %vm331, %v326, %v328
    %v334 = vsel %vm331, %v328, %v330
    %338 = vst [vmem:[#allocation2 + $0x18] sm:$0xf0] %v332
    %339 = vst [vmem:[#allocation2 + $0x20] sm:$0xf0] %v333
    %340 = vst [vmem:[#allocation2 + $0x28] sm:$0xf0] %v334
    %v341 = vld [vmem:[#allocation3] sm:$0xff]
    %v342 = vld [vmem:[#allocation3 + $0x8] sm:$0xff]
    %v343 = vperm.slane %v77, 4
    %v344 = vperm.slane %v78, 4
    %v345 = vperm.slane %v79, 4
    %v349 = vrot.slane %v344, 4
    %v350 = vsel %vm167, %v343, %v349
    %351 = vrot.lane.b32.xlu0 %v350, 19
    %v352 = vpop.permute.xlu0 %351
    %353 = vrot.lane.b32.xlu0 %v345, 19
    %v354 = vpop.permute.xlu0 %353
    %v355 = vrot.slane %v352, 4
    %v356 = vrot.slane %v354, 4
    %vm357 = vcmask 154624
    %v358 = vsel %vm357, %v355, %v352
    %v359 = vsel %vm167, %v355, %v356
    %v360 = vsel %vm357, %v359, %v354
    %v363 = vmul.f32 %v341, %v358
    %v364 = vmul.f32 %v342, %v360
    %367 = vst [vmem:[#allocation1] ss:$2 sm:$0xff] %v363
    %s368 = scalar_lea.vmem [#allocation1], 16
    %369 = vst [vmem:[%s368] ss:$2 sm:$0xff] %v364
    %v370 = vld.sshfl [vmem:[#allocation1] sm:$0xff pattern:$0x75316420]
    %v371 = vld.sshfl [vmem:[#allocation1 + $0x8] sm:$0xff pattern:$0x75316420]
    %v372 = vld.sshfl [vmem:[#allocation1 + $0x10] sm:$0xff pattern:$0x75316420]
    %v373 = vld.sshfl [vmem:[#allocation1 + $0x18] sm:$0xff pattern:$0x75316420]
    %374 = vrot.lane.b32.xlu0 %v370, 109
    %v375 = vpop.permute.xlu0 %374
    %376 = vrot.lane.b32.xlu0 %v371, 109
    %v377 = vpop.permute.xlu0 %376
    %378 = vrot.lane.b32.xlu0 %v372, 109
    %v379 = vpop.permute.xlu0 %378
    %380 = vrot.lane.b32.xlu0 %v373, 109
    %v381 = vpop.permute.xlu0 %380
    %vm382 = vcmask 891904
    %v383 = vsel %vm382, %v375, %v377
    %v384 = vsel %vm382, %v377, %v379
    %v385 = vsel %vm382, %v379, %v381
    %389 = vst [vmem:[#allocation2 + $0x30] sm:$0xf] %v383
    %390 = vst [vmem:[#allocation2 + $0x38] sm:$0xf] %v384
    %391 = vst [vmem:[#allocation2 + $0x40] sm:$0xf] %v385
    %v392 = vld [vmem:[#allocation3] sm:$0xff]
    %v393 = vld [vmem:[#allocation3 + $0x8] sm:$0xff]
    %v394 = vperm.slane %v77, 5
    %v395 = vperm.slane %v78, 5
    %v396 = vperm.slane %v79, 5
    %v400 = vrot.slane %v395, 4
    %v401 = vsel %vm167, %v394, %v400
    %402 = vrot.lane.b32.xlu0 %v401, 20
    %v403 = vpop.permute.xlu0 %402
    %404 = vrot.lane.b32.xlu0 %v396, 20
    %v405 = vpop.permute.xlu0 %404
    %v406 = vrot.slane %v403, 4
    %v407 = vrot.slane %v405, 4
    %vm408 = vcmask 162816
    %v409 = vsel %vm408, %v406, %v403
    %v410 = vsel %vm167, %v406, %v407
    %v411 = vsel %vm408, %v410, %v405
    %v414 = vmul.f32 %v392, %v409
    %v415 = vmul.f32 %v393, %v411
    %s418 = scalar_lea.vmem [#allocation1], 1
    %419 = vst [vmem:[%s418] ss:$2 sm:$0xff] %v414
    %s420 = scalar_lea.vmem [#allocation1], 17
    %421 = vst [vmem:[%s420] ss:$2 sm:$0xff] %v415
    %v422 = vld.sshfl [vmem:[#allocation1] sm:$0xff pattern:$0x75316420]
    %v423 = vld.sshfl [vmem:[#allocation1 + $0x8] sm:$0xff pattern:$0x75316420]
    %v424 = vld.sshfl [vmem:[#allocation1 + $0x10] sm:$0xff pattern:$0x75316420]
    %v425 = vld.sshfl [vmem:[#allocation1 + $0x18] sm:$0xff pattern:$0x75316420]
    %426 = vrot.lane.b32.xlu0 %v422, 108
    %v427 = vpop.permute.xlu0 %426
    %428 = vrot.lane.b32.xlu0 %v423, 108
    %v429 = vpop.permute.xlu0 %428
    %430 = vrot.lane.b32.xlu0 %v424, 108
    %v431 = vpop.permute.xlu0 %430
    %432 = vrot.lane.b32.xlu0 %v425, 108
    %v433 = vpop.permute.xlu0 %432
    %vm434 = vcmask 883712
    %v435 = vsel %vm434, %v427, %v429
    %v436 = vsel %vm434, %v429, %v431
    %v437 = vsel %vm434, %v431, %v433
    %441 = vst [vmem:[#allocation2 + $0x30] sm:$0xf0] %v435
    %442 = vst [vmem:[#allocation2 + $0x38] sm:$0xf0] %v436
    %443 = vst [vmem:[#allocation2 + $0x40] sm:$0xf0] %v437
    %v444 = vld [vmem:[#allocation3] sm:$0xff]
    %v445 = vld [vmem:[#allocation3 + $0x8] sm:$0xff]
    %v446 = vperm.slane %v77, 6
    %v447 = vperm.slane %v78, 6
    %v448 = vperm.slane %v79, 6
    %v452 = vrot.slane %v447, 4
    %v453 = vsel %vm167, %v446, %v452
    %454 = vrot.lane.b32.xlu0 %v453, 36
    %v455 = vpop.permute.xlu0 %454
    %456 = vrot.lane.b32.xlu0 %v448, 36
    %v457 = vpop.permute.xlu0 %456
    %v458 = vrot.slane %v455, 4
    %v459 = vrot.slane %v457, 4
    %vm460 = vcmask 293888
    %v461 = vsel %vm460, %v458, %v455
    %v462 = vsel %vm167, %v458, %v459
    %v463 = vsel %vm460, %v462, %v457
    %v466 = vmul.f32 %v444, %v461
    %v467 = vmul.f32 %v445, %v463
    %470 = vst [vmem:[#allocation1] ss:$2 sm:$0xff] %v466
    %s471 = scalar_lea.vmem [#allocation1], 16
    %472 = vst [vmem:[%s471] ss:$2 sm:$0xff] %v467
    %v473 = vld.sshfl [vmem:[#allocation1] sm:$0xff pattern:$0x75316420]
    %v474 = vld.sshfl [vmem:[#allocation1 + $0x8] sm:$0xff pattern:$0x75316420]
    %v475 = vld.sshfl [vmem:[#allocation1 + $0x10] sm:$0xff pattern:$0x75316420]
    %v476 = vld.sshfl [vmem:[#allocation1 + $0x18] sm:$0xff pattern:$0x75316420]
    %477 = vrot.lane.b32.xlu0 %v473, 92
    %v478 = vpop.permute.xlu0 %477
    %479 = vrot.lane.b32.xlu0 %v474, 92
    %v480 = vpop.permute.xlu0 %479
    %481 = vrot.lane.b32.xlu0 %v475, 92
    %v482 = vpop.permute.xlu0 %481
    %483 = vrot.lane.b32.xlu0 %v476, 92
    %v484 = vpop.permute.xlu0 %483
    %vm485 = vcmask 752640
    %v486 = vsel %vm485, %v478, %v480
    %v487 = vsel %vm485, %v480, %v482
    %v488 = vsel %vm485, %v482, %v484
    %492 = vst [vmem:[#allocation2 + $0x48] sm:$0xf] %v486
    %493 = vst [vmem:[#allocation2 + $0x50] sm:$0xf] %v487
    %494 = vst [vmem:[#allocation2 + $0x58] sm:$0xf] %v488
    %v495 = vld [vmem:[#allocation3] sm:$0xff]
    %v496 = vld [vmem:[#allocation3 + $0x8] sm:$0xff]
    %v497 = vperm.slane %v77, 7
    %v498 = vperm.slane %v78, 7
    %v499 = vperm.slane %v79, 7
    %v503 = vrot.slane %v498, 4
    %v504 = vsel %vm167, %v497, %v503
    %505 = vrot.lane.b32.xlu0 %v504, 37
    %v506 = vpop.permute.xlu0 %505
    %507 = vrot.lane.b32.xlu0 %v499, 37
    %v508 = vpop.permute.xlu0 %507
    %v509 = vrot.slane %v506, 4
    %v510 = vrot.slane %v508, 4
    %vm511 = vcmask 302080
    %v512 = vsel %vm511, %v509, %v506
    %v513 = vsel %vm167, %v509, %v510
    %v514 = vsel %vm511, %v513, %v508
    %v517 = vmul.f32 %v495, %v512
    %v518 = vmul.f32 %v496, %v514
    %s521 = scalar_lea.vmem [#allocation1], 1
    %522 = vst [vmem:[%s521] ss:$2 sm:$0xff] %v517
    %s523 = scalar_lea.vmem [#allocation1], 17
    %524 = vst [vmem:[%s523] ss:$2 sm:$0xff] %v518
    %v525 = vld.sshfl [vmem:[#allocation1] sm:$0xff pattern:$0x75316420]
    %v526 = vld.sshfl [vmem:[#allocation1 + $0x8] sm:$0xff pattern:$0x75316420]
    %v527 = vld.sshfl [vmem:[#allocation1 + $0x10] sm:$0xff pattern:$0x75316420]
    %v528 = vld.sshfl [vmem:[#allocation1 + $0x18] sm:$0xff pattern:$0x75316420]
    %529 = vrot.lane.b32.xlu0 %v525, 91
    %v530 = vpop.permute.xlu0 %529
    %531 = vrot.lane.b32.xlu0 %v526, 91
    %v532 = vpop.permute.xlu0 %531
    %533 = vrot.lane.b32.xlu0 %v527, 91
    %v534 = vpop.permute.xlu0 %533
    %535 = vrot.lane.b32.xlu0 %v528, 91
    %v536 = vpop.permute.xlu0 %535
    %vm537 = vcmask 744448
    %v538 = vsel %vm537, %v530, %v532
    %v539 = vsel %vm537, %v532, %v534
    %v540 = vsel %vm537, %v534, %v536
    %544 = vst [vmem:[#allocation2 + $0x48] sm:$0xf0] %v538
    %545 = vst [vmem:[#allocation2 + $0x50] sm:$0xf0] %v539
    %546 = vst [vmem:[#allocation2 + $0x58] sm:$0xf0] %v540
    %v547 = vld [vmem:[#allocation3] sm:$0xff]
    %v548 = vld [vmem:[#allocation3 + $0x8] sm:$0xff]
    %v549 = vperm.slane %v80, 0
    %v550 = vperm.slane %v81, 0
    %v551 = vperm.slane %v82, 0
    %v555 = vrot.slane %v550, 4
    %v556 = vsel %vm167, %v549, %v555
    %557 = vrot.lane.b32.xlu0 %v556, 38
    %v558 = vpop.permute.xlu0 %557
    %559 = vrot.lane.b32.xlu0 %v551, 38
    %v560 = vpop.permute.xlu0 %559
    %v561 = vrot.slane %v558, 4
    %v562 = vrot.slane %v560, 4
    %vm563 = vcmask 310272
    %v564 = vsel %vm563, %v561, %v558
    %v565 = vsel %vm167, %v561, %v562
    %v566 = vsel %vm563, %v565, %v560
    %v569 = vmul.f32 %v547, %v564
    %v570 = vmul.f32 %v548, %v566
    %573 = vst [vmem:[#allocation1] ss:$2 sm:$0xff] %v569
    %s574 = scalar_lea.vmem [#allocation1], 16
    %575 = vst [vmem:[%s574] ss:$2 sm:$0xff] %v570
    %v576 = vld.sshfl [vmem:[#allocation1] sm:$0xff pattern:$0x75316420]
    %v577 = vld.sshfl [vmem:[#allocation1 + $0x8] sm:$0xff pattern:$0x75316420]
    %v578 = vld.sshfl [vmem:[#allocation1 + $0x10] sm:$0xff pattern:$0x75316420]
    %v579 = vld.sshfl [vmem:[#allocation1 + $0x18] sm:$0xff pattern:$0x75316420]
    %580 = vrot.lane.b32.xlu0 %v576, 90
    %v581 = vpop.permute.xlu0 %580
    %582 = vrot.lane.b32.xlu0 %v577, 90
    %v583 = vpop.permute.xlu0 %582
    %584 = vrot.lane.b32.xlu0 %v578, 90
    %v585 = vpop.permute.xlu0 %584
    %586 = vrot.lane.b32.xlu0 %v579, 90
    %v587 = vpop.permute.xlu0 %586
    %vm588 = vcmask 736256
    %v589 = vsel %vm588, %v581, %v583
    %v590 = vsel %vm588, %v583, %v585
    %v591 = vsel %vm588, %v585, %v587
    %595 = vst [vmem:[#allocation2 + $0x60] sm:$0xf] %v589
    %596 = vst [vmem:[#allocation2 + $0x68] sm:$0xf] %v590
    %597 = vst [vmem:[#allocation2 + $0x70] sm:$0xf] %v591
    %v598 = vld [vmem:[#allocation2] sm:$0xff]
    %v599 = vld [vmem:[#allocation2 + $0x8] sm:$0xff]
    %v600 = vld [vmem:[#allocation2 + $0x10] sm:$0xff]
    %v601 = vld [vmem:[#allocation2 + $0x18] sm:$0xff]
    %v602 = vld [vmem:[#allocation2 + $0x20] sm:$0xff]
    %v603 = vld [vmem:[#allocation2 + $0x28] sm:$0xff]
    %v604 = vld [vmem:[#allocation2 + $0x30] sm:$0xff]
    %v605 = vld [vmem:[#allocation2 + $0x38] sm:$0xff]
    %v606 = vld [vmem:[#allocation2 + $0x40] sm:$0xff]
    %v607 = vld [vmem:[#allocation2 + $0x48] sm:$0xff]
    %v608 = vld [vmem:[#allocation2 + $0x50] sm:$0xff]
    %v609 = vld [vmem:[#allocation2 + $0x58] sm:$0xff]
    %v610 = vld [vmem:[#allocation2 + $0x60] sm:$0xf]
    %v611 = vld [vmem:[#allocation2 + $0x68] sm:$0xf]
    %v612 = vld [vmem:[#allocation2 + $0x70] sm:$0xf]
    %v614 = vsel %vm460, %v158, 0
    %v617 = vsel %vm167, %v610, 0
    %v620 = vsel %vm167, %v611, 0
    %v623 = vsel %vm167, %v612, 0
    %625 = vmatpush.msra.mxu0 0.0
    %626 = vmatpush.msra.mxu0 0.0
    %627 = vmatpush.msra.mxu0 0.0
    %628 = vmatpush.msra.mxu0 0.0
    %629 = vmatpush.msra.mxu0 0.0
    %630 = vmatpush.msra.mxu0 0.0
    %631 = vmatpush.msra.mxu0 0.0
    %632 = vmatpush.msra.mxu0 0.0
    %633 = vmatpush.msra.mxu0 0.0
    %634 = vmatpush.msra.mxu0 0.0
    %635 = vmatpush.msra.mxu0 0.0
    %636 = vmatpush.msra.mxu0 %v617
    %637 = vmatpush.msra.mxu0 %v607
    %638 = vmatpush.msra.mxu0 %v604
    %639 = vmatpush.msra.mxu0 %v601
    %640 = vmatpush.msra.mxu0 %v598
    %641 = vmatmul.f32.gmra.mxu0 %v614
    %v642 = vpop.f32.mrf.mxu0
    %v643 = vadd.f32 0.0, %v642
    %644 = vdwg.mxu0
    %645 = vmatpush.msra.mxu0 0.0
    %646 = vmatpush.msra.mxu0 0.0
    %647 = vmatpush.msra.mxu0 0.0
    %648 = vmatpush.msra.mxu0 0.0
    %649 = vmatpush.msra.mxu0 0.0
    %650 = vmatpush.msra.mxu0 0.0
    %651 = vmatpush.msra.mxu0 0.0
    %652 = vmatpush.msra.mxu0 0.0
    %653 = vmatpush.msra.mxu0 0.0
    %654 = vmatpush.msra.mxu0 0.0
    %655 = vmatpush.msra.mxu0 0.0
    %656 = vmatpush.msra.mxu0 %v620
    %657 = vmatpush.msra.mxu0 %v608
    %658 = vmatpush.msra.mxu0 %v605
    %659 = vmatpush.msra.mxu0 %v602
    %660 = vmatpush.msra.mxu0 %v599
    %661 = vmatmul.f32.gmra.mxu0 %v614
    %v662 = vpop.f32.mrf.mxu0
    %v663 = vadd.f32 0.0, %v662
    %664 = vdwg.mxu0
    %665 = vmatpush.msra.mxu0 0.0
    %666 = vmatpush.msra.mxu0 0.0
    %667 = vmatpush.msra.mxu0 0.0
    %668 = vmatpush.msra.mxu0 0.0
    %669 = vmatpush.msra.mxu0 0.0
    %670 = vmatpush.msra.mxu0 0.0
    %671 = vmatpush.msra.mxu0 0.0
    %672 = vmatpush.msra.mxu0 0.0
    %673 = vmatpush.msra.mxu0 0.0
    %674 = vmatpush.msra.mxu0 0.0
    %675 = vmatpush.msra.mxu0 0.0
    %676 = vmatpush.msra.mxu0 %v623
    %677 = vmatpush.msra.mxu0 %v609
    %678 = vmatpush.msra.mxu0 %v606
    %679 = vmatpush.msra.mxu0 %v603
    %680 = vmatpush.msra.mxu0 %v600
    %681 = vmatmul.f32.gmra.mxu0 %v614
    %v682 = vpop.f32.mrf.mxu0
    %v683 = vadd.f32 0.0, %v682
    %684 = vdwg.mxu0
    %v685 = vadd.f32 %v116, %v643
    %v686 = vadd.f32 %v136, %v663
    %v687 = vadd.f32 %v156, %v683
    %688 = vst [vmem:[#allocation11] sm:$0xff] %v685
    %689 = vst [vmem:[#allocation11 + $0x8] sm:$0xff] %v686
    %690 = vst [vmem:[#allocation11 + $0x10] sm:$0xff] %v687
    %s691 = scalar_lea.vmem [#allocation3], 16
    %v692 = vld [vmem:[%s691] sm:$0xff]
    %v693 = vld [vmem:[%s691 + $0x8] sm:$0xf]
    %v694 = vmul.f32 %v692, %v168
    %v695 = vmul.f32 %v693, %v163
    %698 = vst [vmem:[#allocation1] ss:$2 sm:$0xff] %v694
    %s699 = scalar_lea.vmem [#allocation1], 16
    %700 = vst [vmem:[%s699] ss:$2 sm:$0xff] %v695
    %v701 = vld.sshfl [vmem:[#allocation1] sm:$0xff pattern:$0x75316420]
    %v702 = vld.sshfl [vmem:[#allocation1 + $0x8] sm:$0xff pattern:$0x75316420]
    %v703 = vld.sshfl [vmem:[#allocation1 + $0x10] sm:$0xff pattern:$0x75316420]
    %707 = vst [vmem:[#allocation2] sm:$0xf] %v701
    %708 = vst [vmem:[#allocation2 + $0x8] sm:$0xf] %v702
    %709 = vst [vmem:[#allocation2 + $0x10] sm:$0xf] %v703
    %v710 = vld [vmem:[%s691] sm:$0xff]
    %v711 = vld [vmem:[%s691 + $0x8] sm:$0xff]
    %v712 = vmul.f32 %v710, %v203
    %v713 = vmul.f32 %v711, %v205
    %s716 = scalar_lea.vmem [#allocation1], 1
    %717 = vst [vmem:[%s716] ss:$2 sm:$0xff] %v712
    %s718 = scalar_lea.vmem [#allocation1], 17
    %719 = vst [vmem:[%s718] ss:$2 sm:$0xff] %v713
    %v720 = vld.sshfl [vmem:[#allocation1] sm:$0xff pattern:$0x75316420]
    %v721 = vld.sshfl [vmem:[#allocation1 + $0x8] sm:$0xff pattern:$0x75316420]
    %v722 = vld.sshfl [vmem:[#allocation1 + $0x10] sm:$0xff pattern:$0x75316420]
    %v723 = vld.sshfl [vmem:[#allocation1 + $0x18] sm:$0xff pattern:$0x75316420]
    %724 = vrot.lane.b32.xlu0 %v720, 127
    %v725 = vpop.permute.xlu0 %724
    %726 = vrot.lane.b32.xlu0 %v721, 127
    %v727 = vpop.permute.xlu0 %726
    %728 = vrot.lane.b32.xlu0 %v722, 127
    %v729 = vpop.permute.xlu0 %728
    %730 = vrot.lane.b32.xlu0 %v723, 127
    %v731 = vpop.permute.xlu0 %730
    %v732 = vsel %vm228, %v725, %v727
    %v733 = vsel %vm228, %v727, %v729
    %v734 = vsel %vm228, %v729, %v731
    %738 = vst [vmem:[#allocation2] sm:$0xf0] %v732
    %739 = vst [vmem:[#allocation2 + $0x8] sm:$0xf0] %v733
    %740 = vst [vmem:[#allocation2 + $0x10] sm:$0xf0] %v734
    %v741 = vld [vmem:[%s691] sm:$0xff]
    %v742 = vld [vmem:[%s691 + $0x8] sm:$0xff]
    %v743 = vmul.f32 %v741, %v255
    %v744 = vmul.f32 %v742, %v257
    %747 = vst [vmem:[#allocation1] ss:$2 sm:$0xff] %v743
    %s748 = scalar_lea.vmem [#allocation1], 16
    %749 = vst [vmem:[%s748] ss:$2 sm:$0xff] %v744
    %v750 = vld.sshfl [vmem:[#allocation1] sm:$0xff pattern:$0x75316420]
    %v751 = vld.sshfl [vmem:[#allocation1 + $0x8] sm:$0xff pattern:$0x75316420]
    %v752 = vld.sshfl [vmem:[#allocation1 + $0x10] sm:$0xff pattern:$0x75316420]
    %v753 = vld.sshfl [vmem:[#allocation1 + $0x18] sm:$0xff pattern:$0x75316420]
    %754 = vrot.lane.b32.xlu0 %v750, 126
    %v755 = vpop.permute.xlu0 %754
    %756 = vrot.lane.b32.xlu0 %v751, 126
    %v757 = vpop.permute.xlu0 %756
    %758 = vrot.lane.b32.xlu0 %v752, 126
    %v759 = vpop.permute.xlu0 %758
    %760 = vrot.lane.b32.xlu0 %v753, 126
    %v761 = vpop.permute.xlu0 %760
    %v762 = vsel %vm279, %v755, %v757
    %v763 = vsel %vm279, %v757, %v759
    %v764 = vsel %vm279, %v759, %v761
    %768 = vst [vmem:[#allocation2 + $0x18] sm:$0xf] %v762
    %769 = vst [vmem:[#allocation2 + $0x20] sm:$0xf] %v763
    %770 = vst [vmem:[#allocation2 + $0x28] sm:$0xf] %v764
    %v771 = vld [vmem:[%s691] sm:$0xff]
    %v772 = vld [vmem:[%s691 + $0x8] sm:$0xff]
    %v773 = vmul.f32 %v771, %v306
    %v774 = vmul.f32 %v772, %v308
    %s777 = scalar_lea.vmem [#allocation1], 1
    %778 = vst [vmem:[%s777] ss:$2 sm:$0xff] %v773
    %s779 = scalar_lea.vmem [#allocation1], 17
    %780 = vst [vmem:[%s779] ss:$2 sm:$0xff] %v774
    %v781 = vld.sshfl [vmem:[#allocation1] sm:$0xff pattern:$0x75316420]
    %v782 = vld.sshfl [vmem:[#allocation1 + $0x8] sm:$0xff pattern:$0x75316420]
    %v783 = vld.sshfl [vmem:[#allocation1 + $0x10] sm:$0xff pattern:$0x75316420]
    %v784 = vld.sshfl [vmem:[#allocation1 + $0x18] sm:$0xff pattern:$0x75316420]
    %785 = vrot.lane.b32.xlu0 %v781, 110
    %v786 = vpop.permute.xlu0 %785
    %787 = vrot.lane.b32.xlu0 %v782, 110
    %v788 = vpop.permute.xlu0 %787
    %789 = vrot.lane.b32.xlu0 %v783, 110
    %v790 = vpop.permute.xlu0 %789
    %791 = vrot.lane.b32.xlu0 %v784, 110
    %v792 = vpop.permute.xlu0 %791
    %v793 = vsel %vm331, %v786, %v788
    %v794 = vsel %vm331, %v788, %v790
    %v795 = vsel %vm331, %v790, %v792
    %799 = vst [vmem:[#allocation2 + $0x18] sm:$0xf0] %v793
    %800 = vst [vmem:[#allocation2 + $0x20] sm:$0xf0] %v794
    %801 = vst [vmem:[#allocation2 + $0x28] sm:$0xf0] %v795
    %v802 = vld [vmem:[%s691] sm:$0xff]
    %v803 = vld [vmem:[%s691 + $0x8] sm:$0xff]
    %v804 = vmul.f32 %v802, %v358
    %v805 = vmul.f32 %v803, %v360
    %808 = vst [vmem:[#allocation1] ss:$2 sm:$0xff] %v804
    %s809 = scalar_lea.vmem [#allocation1], 16
    %810 = vst [vmem:[%s809] ss:$2 sm:$0xff] %v805
    %v811 = vld.sshfl [vmem:[#allocation1] sm:$0xff pattern:$0x75316420]
    %v812 = vld.sshfl [vmem:[#allocation1 + $0x8] sm:$0xff pattern:$0x75316420]
    %v813 = vld.sshfl [vmem:[#allocation1 + $0x10] sm:$0xff pattern:$0x75316420]
    %v814 = vld.sshfl [vmem:[#allocation1 + $0x18] sm:$0xff pattern:$0x75316420]
    %815 = vrot.lane.b32.xlu0 %v811, 109
    %v816 = vpop.permute.xlu0 %815
    %817 = vrot.lane.b32.xlu0 %v812, 109
    %v818 = vpop.permute.xlu0 %817
    %819 = vrot.lane.b32.xlu0 %v813, 109
    %v820 = vpop.permute.xlu0 %819
    %821 = vrot.lane.b32.xlu0 %v814, 109
    %v822 = vpop.permute.xlu0 %821
    %v823 = vsel %vm382, %v816, %v818
    %v824 = vsel %vm382, %v818, %v820
    %v825 = vsel %vm382, %v820, %v822
    %829 = vst [vmem:[#allocation2 + $0x30] sm:$0xf] %v823
    %830 = vst [vmem:[#allocation2 + $0x38] sm:$0xf] %v824
    %831 = vst [vmem:[#allocation2 + $0x40] sm:$0xf] %v825
    %v832 = vld [vmem:[%s691] sm:$0xff]
    %v833 = vld [vmem:[%s691 + $0x8] sm:$0xff]
    %v834 = vmul.f32 %v832, %v409
    %v835 = vmul.f32 %v833, %v411
    %s838 = scalar_lea.vmem [#allocation1], 1
    %839 = vst [vmem:[%s838] ss:$2 sm:$0xff] %v834
    %s840 = scalar_lea.vmem [#allocation1], 17
    %841 = vst [vmem:[%s840] ss:$2 sm:$0xff] %v835
    %v842 = vld.sshfl [vmem:[#allocation1] sm:$0xff pattern:$0x75316420]
    %v843 = vld.sshfl [vmem:[#allocation1 + $0x8] sm:$0xff pattern:$0x75316420]
    %v844 = vld.sshfl [vmem:[#allocation1 + $0x10] sm:$0xff pattern:$0x75316420]
    %v845 = vld.sshfl [vmem:[#allocation1 + $0x18] sm:$0xff pattern:$0x75316420]
    %846 = vrot.lane.b32.xlu0 %v842, 108
    %v847 = vpop.permute.xlu0 %846
    %848 = vrot.lane.b32.xlu0 %v843, 108
    %v849 = vpop.permute.xlu0 %848
    %850 = vrot.lane.b32.xlu0 %v844, 108
    %v851 = vpop.permute.xlu0 %850
    %852 = vrot.lane.b32.xlu0 %v845, 108
    %v853 = vpop.permute.xlu0 %852
    %v854 = vsel %vm434, %v847, %v849
    %v855 = vsel %vm434, %v849, %v851
    %v856 = vsel %vm434, %v851, %v853
    %860 = vst [vmem:[#allocation2 + $0x30] sm:$0xf0] %v854
    %861 = vst [vmem:[#allocation2 + $0x38] sm:$0xf0] %v855
    %862 = vst [vmem:[#allocation2 + $0x40] sm:$0xf0] %v856
    %v863 = vld [vmem:[%s691] sm:$0xff]
    %v864 = vld [vmem:[%s691 + $0x8] sm:$0xff]
    %v865 = vmul.f32 %v863, %v461
    %v866 = vmul.f32 %v864, %v463
    %869 = vst [vmem:[#allocation1] ss:$2 sm:$0xff] %v865
    %s870 = scalar_lea.vmem [#allocation1], 16
    %871 = vst [vmem:[%s870] ss:$2 sm:$0xff] %v866
    %v872 = vld.sshfl [vmem:[#allocation1] sm:$0xff pattern:$0x75316420]
    %v873 = vld.sshfl [vmem:[#allocation1 + $0x8] sm:$0xff pattern:$0x75316420]
    %v874 = vld.sshfl [vmem:[#allocation1 + $0x10] sm:$0xff pattern:$0x75316420]
    %v875 = vld.sshfl [vmem:[#allocation1 + $0x18] sm:$0xff pattern:$0x75316420]
    %876 = vrot.lane.b32.xlu0 %v872, 92
    %v877 = vpop.permute.xlu0 %876
    %878 = vrot.lane.b32.xlu0 %v873, 92
    %v879 = vpop.permute.xlu0 %878
    %880 = vrot.lane.b32.xlu0 %v874, 92
    %v881 = vpop.permute.xlu0 %880
    %882 = vrot.lane.b32.xlu0 %v875, 92
    %v883 = vpop.permute.xlu0 %882
    %v884 = vsel %vm485, %v877, %v879
    %v885 = vsel %vm485, %v879, %v881
    %v886 = vsel %vm485, %v881, %v883
    %890 = vst [vmem:[#allocation2 + $0x48] sm:$0xf] %v884
    %891 = vst [vmem:[#allocation2 + $0x50] sm:$0xf] %v885
    %892 = vst [vmem:[#allocation2 + $0x58] sm:$0xf] %v886
    %v893 = vld [vmem:[%s691] sm:$0xff]
    %v894 = vld [vmem:[%s691 + $0x8] sm:$0xff]
    %v895 = vmul.f32 %v893, %v512
    %v896 = vmul.f32 %v894, %v514
    %s899 = scalar_lea.vmem [#allocation1], 1
    %900 = vst [vmem:[%s899] ss:$2 sm:$0xff] %v895
    %s901 = scalar_lea.vmem [#allocation1], 17
    %902 = vst [vmem:[%s901] ss:$2 sm:$0xff] %v896
    %v903 = vld.sshfl [vmem:[#allocation1] sm:$0xff pattern:$0x75316420]
    %v904 = vld.sshfl [vmem:[#allocation1 + $0x8] sm:$0xff pattern:$0x75316420]
    %v905 = vld.sshfl [vmem:[#allocation1 + $0x10] sm:$0xff pattern:$0x75316420]
    %v906 = vld.sshfl [vmem:[#allocation1 + $0x18] sm:$0xff pattern:$0x75316420]
    %907 = vrot.lane.b32.xlu0 %v903, 91
    %v908 = vpop.permute.xlu0 %907
    %909 = vrot.lane.b32.xlu0 %v904, 91
    %v910 = vpop.permute.xlu0 %909
    %911 = vrot.lane.b32.xlu0 %v905, 91
    %v912 = vpop.permute.xlu0 %911
    %913 = vrot.lane.b32.xlu0 %v906, 91
    %v914 = vpop.permute.xlu0 %913
    %v915 = vsel %vm537, %v908, %v910
    %v916 = vsel %vm537, %v910, %v912
    %v917 = vsel %vm537, %v912, %v914
    %921 = vst [vmem:[#allocation2 + $0x48] sm:$0xf0] %v915
    %922 = vst [vmem:[#allocation2 + $0x50] sm:$0xf0] %v916
    %923 = vst [vmem:[#allocation2 + $0x58] sm:$0xf0] %v917
    %v924 = vld [vmem:[%s691] sm:$0xff]
    %v925 = vld [vmem:[%s691 + $0x8] sm:$0xff]
    %v926 = vmul.f32 %v924, %v564
    %v927 = vmul.f32 %v925, %v566
    %930 = vst [vmem:[#allocation1] ss:$2 sm:$0xff] %v926
    %s931 = scalar_lea.vmem [#allocation1], 16
    %932 = vst [vmem:[%s931] ss:$2 sm:$0xff] %v927
    %v933 = vld.sshfl [vmem:[#allocation1] sm:$0xff pattern:$0x75316420]
    %v934 = vld.sshfl [vmem:[#allocation1 + $0x8] sm:$0xff pattern:$0x75316420]
    %v935 = vld.sshfl [vmem:[#allocation1 + $0x10] sm:$0xff pattern:$0x75316420]
    %v936 = vld.sshfl [vmem:[#allocation1 + $0x18] sm:$0xff pattern:$0x75316420]
    %937 = vrot.lane.b32.xlu0 %v933, 90
    %v938 = vpop.permute.xlu0 %937
    %939 = vrot.lane.b32.xlu0 %v934, 90
    %v940 = vpop.permute.xlu0 %939
    %941 = vrot.lane.b32.xlu0 %v935, 90
    %v942 = vpop.permute.xlu0 %941
    %943 = vrot.lane.b32.xlu0 %v936, 90
    %v944 = vpop.permute.xlu0 %943
    %v945 = vsel %vm588, %v938, %v940
    %v946 = vsel %vm588, %v940, %v942
    %v947 = vsel %vm588, %v942, %v944
    %951 = vst [vmem:[#allocation2 + $0x60] sm:$0xf] %v945
    %952 = vst [vmem:[#allocation2 + $0x68] sm:$0xf] %v946
    %953 = vst [vmem:[#allocation2 + $0x70] sm:$0xf] %v947
    %v954 = vld [vmem:[#allocation2] sm:$0xff]
    %v955 = vld [vmem:[#allocation2 + $0x8] sm:$0xff]
    %v956 = vld [vmem:[#allocation2 + $0x10] sm:$0xff]
    %v957 = vld [vmem:[#allocation2 + $0x18] sm:$0xff]
    %v958 = vld [vmem:[#allocation2 + $0x20] sm:$0xff]
    %v959 = vld [vmem:[#allocation2 + $0x28] sm:$0xff]
    %v960 = vld [vmem:[#allocation2 + $0x30] sm:$0xff]
    %v961 = vld [vmem:[#allocation2 + $0x38] sm:$0xff]
    %v962 = vld [vmem:[#allocation2 + $0x40] sm:$0xff]
    %v963 = vld [vmem:[#allocation2 + $0x48] sm:$0xff]
    %v964 = vld [vmem:[#allocation2 + $0x50] sm:$0xff]
    %v965 = vld [vmem:[#allocation2 + $0x58] sm:$0xff]
    %v966 = vld [vmem:[#allocation2 + $0x60] sm:$0xf]
    %v967 = vld [vmem:[#allocation2 + $0x68] sm:$0xf]
    %v968 = vld [vmem:[#allocation2 + $0x70] sm:$0xf]
    %v970 = vsel %vm167, %v966, 0
    %v973 = vsel %vm167, %v967, 0
    %v976 = vsel %vm167, %v968, 0
    %978 = vmatpush.msra.mxu0 0.0
    %979 = vmatpush.msra.mxu0 0.0
    %980 = vmatpush.msra.mxu0 0.0
    %981 = vmatpush.msra.mxu0 0.0
    %982 = vmatpush.msra.mxu0 0.0
    %983 = vmatpush.msra.mxu0 0.0
    %984 = vmatpush.msra.mxu0 0.0
    %985 = vmatpush.msra.mxu0 0.0
    %986 = vmatpush.msra.mxu0 0.0
    %987 = vmatpush.msra.mxu0 0.0
    %988 = vmatpush.msra.mxu0 0.0
    %989 = vmatpush.msra.mxu0 %v970
    %990 = vmatpush.msra.mxu0 %v963
    %991 = vmatpush.msra.mxu0 %v960
    %992 = vmatpush.msra.mxu0 %v957
    %993 = vmatpush.msra.mxu0 %v954
    %994 = vmatmul.f32.gmra.mxu0 %v614
    %v995 = vpop.f32.mrf.mxu0
    %v996 = vadd.f32 0.0, %v995
    %997 = vdwg.mxu0
    %998 = vmatpush.msra.mxu0 0.0
    %999 = vmatpush.msra.mxu0 0.0
    %1000 = vmatpush.msra.mxu0 0.0
    %1001 = vmatpush.msra.mxu0 0.0
    %1002 = vmatpush.msra.mxu0 0.0
    %1003 = vmatpush.msra.mxu0 0.0
    %1004 = vmatpush.msra.mxu0 0.0
    %1005 = vmatpush.msra.mxu0 0.0
    %1006 = vmatpush.msra.mxu0 0.0
    %1007 = vmatpush.msra.mxu0 0.0
    %1008 = vmatpush.msra.mxu0 0.0
    %1009 = vmatpush.msra.mxu0 %v973
    %1010 = vmatpush.msra.mxu0 %v964
    %1011 = vmatpush.msra.mxu0 %v961
    %1012 = vmatpush.msra.mxu0 %v958
    %1013 = vmatpush.msra.mxu0 %v955
    %1014 = vmatmul.f32.gmra.mxu0 %v614
    %v1015 = vpop.f32.mrf.mxu0
    %v1016 = vadd.f32 0.0, %v1015
    %1017 = vdwg.mxu0
    %1018 = vmatpush.msra.mxu0 0.0
    %1019 = vmatpush.msra.mxu0 0.0
    %1020 = vmatpush.msra.mxu0 0.0
    %1021 = vmatpush.msra.mxu0 0.0
    %1022 = vmatpush.msra.mxu0 0.0
    %1023 = vmatpush.msra.mxu0 0.0
    %1024 = vmatpush.msra.mxu0 0.0
    %1025 = vmatpush.msra.mxu0 0.0
    %1026 = vmatpush.msra.mxu0 0.0
    %1027 = vmatpush.msra.mxu0 0.0
    %1028 = vmatpush.msra.mxu0 0.0
    %1029 = vmatpush.msra.mxu0 %v976
    %1030 = vmatpush.msra.mxu0 %v965
    %1031 = vmatpush.msra.mxu0 %v962
    %1032 = vmatpush.msra.mxu0 %v959
    %1033 = vmatpush.msra.mxu0 %v956
    %1034 = vmatmul.f32.gmra.mxu0 %v614
    %v1035 = vpop.f32.mrf.mxu0
    %v1036 = vadd.f32 0.0, %v1035
    %1037 = vdwg.mxu0
    %v1038 = vadd.f32 %v116, %v996
    %v1039 = vadd.f32 %v136, %v1016
    %v1040 = vadd.f32 %v156, %v1036
    %s1041 = scalar_lea.vmem [#allocation11], 24
    %1042 = vst [vmem:[%s1041] sm:$0xff] %v1038
    %1043 = vst [vmem:[%s1041 + $0x8] sm:$0xff] %v1039
    %1044 = vst [vmem:[%s1041 + $0x10] sm:$0xff] %v1040
    // Predicated region
    $region34: #{tpu_custom_call.1} parent=1 // pred_check
      _
    $region35: #{tpu_custom_call.1} parent=1 // pred_check_branch
      %1046 = sbr.rel (0) target = $region37
    $region36: #{tpu_custom_call.1} parent=1 // pred_region
      %1048 = vsyncadd [#allocation5], 0
      %s1049 = sshll.u32 [#allocation11], 4
      %s1050 = int_to_ptr.vmem [resolvable:$true] %s1049
      %s1051 = sshll.u32 %s4, 4
      %s1052 = int_to_ptr.hbm [resolvable:$true] %s1051
      %1057 = dma.vmem_to_hbm [thread:$0]  %s1050, 768, %s1052, [#allocation5], 384, 384, 24
    $region37: #{tpu_custom_call.1} parent=1 // pred_fallthru
      _
    // Predicated region
    $region38: #{tpu_custom_call.1} parent=1 // pred_check
      _
    $region39: #{tpu_custom_call.1} parent=1 // pred_check_branch
      %1059 = sbr.rel (0) target = $region41
    $region40: #{tpu_custom_call.1} parent=1 // pred_region
      %1061 = dma.done [#allocation5], 768
    $region41: #{tpu_custom_call.1} parent=1 // pred_fallthru
      _
    %1062 = vsyncpa [#allocation4], 1
    %1063 = vsyncpa [#allocation7], 1
    %1064 = vsyncpa [#allocation10], 1
    %1065 = vsyncpa [#allocation5], 1

</llo_original>
